<compile_context>
chip_gen: v7x
topology: tpu7x:2x2x1
jax: 0.10.0
libtpu: 0.0.40
codegen_flags: <defaults>
</compile_context>

<pallas_src>
import jax
import jax.numpy as jnp
from jax.experimental import pallas as pl
from jax.experimental.pallas import tpu as pltpu


def _lstm_fc_kernel(x_ref,        # (Bp, T*I)   batch-first rows, f32
                    w_in_ref,     # (T*I, T*4H) block-diag W_ih0^T, bf16
                    b0_ref,       # (1, T*4H)   (b_ih0 + b_hh0) tiled T times, f32
                    wa_ref,       # (H, 8H)     [W_hh0^T | W_ih1^T], bf16
                    whh1_ref,     # (H, 4H)     W_hh1^T, bf16
                    b1_ref,       # (1, 4H)     b_ih1 + b_hh1, f32
                    wfc_ref,      # (H, Opad)   fc.weight^T zero-padded, bf16
                    bfc_ref,      # (1, Opad)   fc.bias zero-padded, f32
                    out_ref):     # (Bp, Opad)  f32
    H = whh1_ref.shape[0]
    G = 4 * H
    T = b0_ref.shape[1] // G
    Bp = out_ref.shape[0]

    # ---- loop-invariant weight/bias loads stay resident in vregs ----------
    wa = wa_ref[...]
    whh1 = whh1_ref[...]
    b1 = b1_ref[...]

    # ---- layer-0 input projection (+ bias) for ALL timesteps: one MXU dot,
    #      off the recurrent critical path -----------------------------------
    xp = jnp.dot(x_ref[...].astype(jnp.bfloat16), w_in_ref[...],
                 preferred_element_type=jnp.float32) + b0_ref[...]   # (Bp, T*4H)

    def act(gates):
        # gate order [i, f, o, g]: sigmoid over 3H lanes, tanh over H lanes
        sg = jax.nn.sigmoid(gates[:, :3 * H])
        g = jnp.tanh(gates[:, 3 * H:])
        return sg[:, :H], sg[:, H:2 * H], sg[:, 2 * H:3 * H], g

    # layer 0, step 0 (h0 = c0 = 0, so the recurrent term vanishes)
    i, f, o, g = act(xp[:, :G])
    c0 = i * g
    h0 = o * jnp.tanh(c0)
    h1 = jnp.zeros((Bp, H), jnp.float32)
    c1 = jnp.zeros((Bp, H), jnp.float32)

    # Skewed, fully unrolled recurrence (T is small; LLO sees across steps).
    # TODO(synk): if T is scaled up, switch to lax.fori_loop(..., unroll=4)
    # chunks with per-chunk xp loads to bound vreg live ranges.
    for t in range(T):
        # One fused dot on the h0 chain:
        #   cols 0:4H  = layer-0 recurrent gate contribution for step t+1
        #   cols 4H:8H = layer-1 input gate contribution for step t
        fused = jnp.dot(h0.astype(jnp.bfloat16), wa,
                        preferred_element_type=jnp.float32)           # (Bp, 8H)

        # layer 1, step t (the h1 dot is independent of h0 -> overlaps)
        g1 = fused[:, G:] + b1 + jnp.dot(h1.astype(jnp.bfloat16), whh1,
                                         preferred_element_type=jnp.float32)
        i, f, o, g = act(g1)
        c1 = f * c1 + i * g
        h1 = o * jnp.tanh(c1)

        # layer 0, step t+1
        if t + 1 < T:
            g0 = xp[:, (t + 1) * G:(t + 2) * G] + fused[:, :G]
            i, f, o, g = act(g0)
            c0 = f * c0 + i * g
            h0 = o * jnp.tanh(c0)

    # fc on the last timestep of the top layer; Opad lanes -> unmasked store
    out_ref[...] = (jnp.dot(h1.astype(jnp.bfloat16), wfc_ref[...],
                            preferred_element_type=jnp.float32)
                    + bfc_ref[...])


def prepare_params(params, seq_len):
    """One-time parameter prep: transpose, gate reorder, fusion stacking,
    block-diagonal input-projection weight, fc lane padding, bf16 casts."""
    (wih0, whh0, bih0, bhh0,
     wih1, whh1, bih1, bhh1,
     wfc, bfc) = params
    H = whh0.shape[1]
    I = wih0.shape[1]
    O = wfc.shape[0]
    T = seq_len

    def reorder(w):
        # torch gate order [i, f, g, o] -> [i, f, o, g] along the 4H axis
        i, f, g, o = jnp.split(w, 4, axis=-1)
        return jnp.concatenate([i, f, o, g], axis=-1)

    wih0_t = reorder(wih0.T.astype(jnp.float32))                 # (I, 4H)
    whh0_t = reorder(whh0.T.astype(jnp.float32))                 # (H, 4H)
    b0 = reorder((bih0 + bhh0)[None, :].astype(jnp.float32))     # (1, 4H)
    wih1_t = reorder(wih1.T.astype(jnp.float32))                 # (H, 4H)
    whh1_t = reorder(whh1.T.astype(jnp.float32))                 # (H, 4H)
    b1 = reorder((bih1 + bhh1)[None, :].astype(jnp.float32))     # (1, 4H)

    # Block-diagonal input projection over all T steps: consumes batch-first x
    # reshaped to (B, T*I), so no host-side time-major transpose is needed.
    # The extra (mostly-zero) columns are free given the MXU slack here.
    w_in_big = jnp.kron(jnp.eye(T, dtype=jnp.float32), wih0_t)   # (T*I, T*4H)
    b0_big = jnp.tile(b0, (1, T))                                # (1, T*4H)

    # fused h0 weight: layer-0 recurrent | layer-1 input
    wa = jnp.concatenate([whh0_t, wih1_t], axis=1)               # (H, 8H)

    # fc padded to a lane-dense 128-wide output
    o_pad = max(128, ((O + 127) // 128) * 128)
    wfc_t = jnp.zeros((H, o_pad), jnp.float32).at[:, :O].set(wfc.T.astype(jnp.float32))
    bfc_p = jnp.zeros((1, o_pad), jnp.float32).at[:, :O].set(bfc[None, :].astype(jnp.float32))

    bf16 = lambda a: a.astype(jnp.bfloat16)
    return dict(
        arrays=(bf16(w_in_big), b0_big, bf16(wa), bf16(whh1_t), b1,
                bf16(wfc_t), bfc_p),
        input_size=I, hidden=H, out_dim=O, out_pad=o_pad, seq_len=T)


def make_lstm_forward(params, seq_len):
    """Build a jitted batch-first forward: x (B, T, I) -> (B, O).

    Prep runs once here; the small reshape/pad and the output slice live in
    the same jit as the pallas_call so there are no extra per-call launches.
    """
    p = prepare_params(params, seq_len)
    arrays = p["arrays"]
    T, I, O, o_pad = p["seq_len"], p["input_size"], p["out_dim"], p["out_pad"]

    @jax.jit
    def forward(x):
        B = x.shape[0]
        Bp = max(8, ((B + 7) // 8) * 8)   # pad batch to the 8-sublane tile
        x2 = x.astype(jnp.float32).reshape(B, T * I)   # contiguous: free
        x2 = jnp.pad(x2, ((0, Bp - B), (0, 0)))        # padded rows sliced off below
        ins = (x2,) + arrays
        full = lambda a: pl.BlockSpec(a.shape, lambda i: (0,) * a.ndim)

        # TODO(synk): once Bp > 16, add a leading "parallel" grid axis over
        # 8-row batch blocks so v7x's second TensorCore runs half the batch.
        # TODO(synk): if T/B scale up, tile T via a grid axis (h/c carried in
        # VMEM scratch), size tiles against v7x's 64 MiB VMEM and set
        # vmem_limit_bytes explicitly.
        out = pl.pallas_call(
            _lstm_fc_kernel,
            out_shape=jax.ShapeDtypeStruct((Bp, o_pad), jnp.float32),
            grid=(1,),
            in_specs=[full(a) for a in ins],
            out_specs=pl.BlockSpec((Bp, o_pad), lambda i: (0, 0)),
            compiler_params=pltpu.CompilerParams(
                dimension_semantics=("arbitrary",)),
        )(*ins)
        return out[:B, :O]

    return forward


def _reference_forward(x, params):
    """Pure-JAX f32 reference matching torch.nn.LSTM semantics."""
    (wih0, whh0, bih0, bhh0,
     wih1, whh1, bih1, bhh1,
     wfc, bfc) = params
    B, T, _ = x.shape
    H = whh0.shape[1]

    def cell(x_t, h, c, wih, whh, bih, bhh):
        gates = x_t @ wih.T + bih + h @ whh.T + bhh
        i, f, g, o = jnp.split(gates, 4, axis=-1)
        c_new = jax.nn.sigmoid(f) * c + jax.nn.sigmoid(i) * jnp.tanh(g)
        h_new = jax.nn.sigmoid(o) * jnp.tanh(c_new)
        return h_new, c_new

    h0 = c0 = h1 = c1 = jnp.zeros((B, H), jnp.float32)
    for t in range(T):
        h0, c0 = cell(x[:, t, :], h0, c0, wih0, whh0, bih0, bhh0)
        h1, c1 = cell(h0, h1, c1, wih1, whh1, bih1, bhh1)
    return h1 @ wfc.T + bfc


def _init_params(key, input_size, hidden_size, output_size):
    """Deterministic init mirroring PyTorch's U(-1/sqrt(H), 1/sqrt(H))."""
    ks = jax.random.split(key, 10)
    s = 1.0 / jnp.sqrt(hidden_size)
    u = lambda k, shape: jax.random.uniform(k, shape, jnp.float32, -s, s)
    return (
        u(ks[0], (4 * hidden_size, input_size)),    # w_ih_l0
        u(ks[1], (4 * hidden_size, hidden_size)),   # w_hh_l0
        u(ks[2], (4 * hidden_size,)),               # b_ih_l0
        u(ks[3], (4 * hidden_size,)),               # b_hh_l0
        u(ks[4], (4 * hidden_size, hidden_size)),   # w_ih_l1
        u(ks[5], (4 * hidden_size, hidden_size)),   # w_hh_l1
        u(ks[6], (4 * hidden_size,)),               # b_ih_l1
        u(ks[7], (4 * hidden_size,)),               # b_hh_l1
        u(ks[8], (output_size, hidden_size)),       # fc.weight
        u(ks[9], (output_size,)),                   # fc.bias
    )


if __name__ == "__main__":
    INPUT_SIZE, HIDDEN_SIZE, NUM_LAYERS, OUTPUT_SIZE = 16, 32, 2, 4
    BATCH, SEQ = 2, 8

    key = jax.random.PRNGKey(0)
    k_x, k_p = jax.random.split(key)
    x = jax.random.normal(k_x, (BATCH, SEQ, INPUT_SIZE), jnp.float32)
    params = _init_params(k_p, INPUT_SIZE, HIDDEN_SIZE, OUTPUT_SIZE)

    forward = make_lstm_forward(params, SEQ)   # one-time prep + jit build
    out = forward(x)
    out = jax.block_until_ready(out)

    ref = _reference_forward(x, params)
    assert out.shape == (BATCH, OUTPUT_SIZE)
    # bf16 MXU operands (per perf review) -> relaxed tolerance vs f32 reference
    assert jnp.allclose(out, ref, atol=3e-2, rtol=3e-2), "mismatch vs reference"

    print("KERNEL_OK")
</pallas_src>

<mosaic_0001>
module attributes {stable_mosaic.version = 11 : i64} {
  func.func @_lstm_fc_kernel(%arg0: i32, %arg1: memref<8x128xf32, #tpu.memory_space<vmem>>, %arg2: memref<128x1024xbf16, #tpu.memory_space<vmem>>, %arg3: memref<1x1024xf32, #tpu.memory_space<vmem>>, %arg4: memref<32x256xbf16, #tpu.memory_space<vmem>>, %arg5: memref<32x128xbf16, #tpu.memory_space<vmem>>, %arg6: memref<1x128xf32, #tpu.memory_space<vmem>>, %arg7: memref<32x128xbf16, #tpu.memory_space<vmem>>, %arg8: memref<1x128xf32, #tpu.memory_space<vmem>>, %arg9: memref<8x128xf32, #tpu.memory_space<vmem>>) attributes {dimension_semantics = [#tpu.dimension_semantics<arbitrary>], iteration_bounds = array<i64: 1>, scalar_prefetch = 0 : i64, scratch_operands = 0 : i64, tpu.core_type = #tpu.core_type<tc>, window_params = [{pipeline_mode = #tpu.pipeline_mode<synchronous>, transform_indices = @transform_0, window_bounds = array<i64: 8, 128>}, {pipeline_mode = #tpu.pipeline_mode<synchronous>, transform_indices = @transform_1, window_bounds = array<i64: 128, 1024>}, {pipeline_mode = #tpu.pipeline_mode<synchronous>, transform_indices = @transform_2, window_bounds = array<i64: 1, 1024>}, {pipeline_mode = #tpu.pipeline_mode<synchronous>, transform_indices = @transform_3, window_bounds = array<i64: 32, 256>}, {pipeline_mode = #tpu.pipeline_mode<synchronous>, transform_indices = @transform_4, window_bounds = array<i64: 32, 128>}, {pipeline_mode = #tpu.pipeline_mode<synchronous>, transform_indices = @transform_5, window_bounds = array<i64: 1, 128>}, {pipeline_mode = #tpu.pipeline_mode<synchronous>, transform_indices = @transform_6, window_bounds = array<i64: 32, 128>}, {pipeline_mode = #tpu.pipeline_mode<synchronous>, transform_indices = @transform_7, window_bounds = array<i64: 1, 128>}, {pipeline_mode = #tpu.pipeline_mode<synchronous>, transform_indices = @transform_8, window_bounds = array<i64: 8, 128>}]} {
    %c0 = arith.constant 0 : index
    %c0_0 = arith.constant 0 : index
    %0 = vector.load %arg4[%c0, %c0_0] : memref<32x256xbf16, #tpu.memory_space<vmem>>, vector<32x256xbf16>
    %c0_1 = arith.constant 0 : index
    %c0_2 = arith.constant 0 : index
    %1 = vector.load %arg5[%c0_1, %c0_2] : memref<32x128xbf16, #tpu.memory_space<vmem>>, vector<32x128xbf16>
    %c0_3 = arith.constant 0 : index
    %c0_4 = arith.constant 0 : index
    %2 = vector.load %arg6[%c0_3, %c0_4] : memref<1x128xf32, #tpu.memory_space<vmem>>, vector<1x128xf32>
    %c0_5 = arith.constant 0 : index
    %c0_6 = arith.constant 0 : index
    %3 = vector.load %arg1[%c0_5, %c0_6] : memref<8x128xf32, #tpu.memory_space<vmem>>, vector<8x128xf32>
    %4 = arith.truncf %3 : vector<8x128xf32> to vector<8x128xbf16>
    %c0_7 = arith.constant 0 : index
    %c0_8 = arith.constant 0 : index
    %5 = vector.load %arg2[%c0_7, %c0_8] : memref<128x1024xbf16, #tpu.memory_space<vmem>>, vector<128x1024xbf16>
    %cst = arith.constant dense<0.000000e+00> : vector<8x1024xf32>
    %6 = tpu.matmul %4, %5, %cst {dimension_numbers = #tpu.dot_dimension_numbers<[1], [0], [0], [1], [0, 0, 1, 1], [], []>} : vector<8x128xbf16>, vector<128x1024xbf16>, vector<8x1024xf32> -> vector<8x1024xf32>
    %c0_9 = arith.constant 0 : index
    %c0_10 = arith.constant 0 : index
    %7 = vector.load %arg3[%c0_9, %c0_10] : memref<1x1024xf32, #tpu.memory_space<vmem>>, vector<1x1024xf32>
    %8 = vector.broadcast %7 : vector<1x1024xf32> to vector<8x1024xf32>
    %9 = arith.addf %6, %8 : vector<8x1024xf32>
    %10 = vector.extract_strided_slice %9 {offsets = [0, 0], sizes = [8, 128], strides = [1, 1]} : vector<8x1024xf32> to vector<8x128xf32>
    %11 = vector.extract_strided_slice %10 {offsets = [0, 0], sizes = [8, 96], strides = [1, 1]} : vector<8x128xf32> to vector<8x96xf32>
    %12 = arith.negf %11 : vector<8x96xf32>
    %13 = math.exp %12 : vector<8x96xf32>
    %cst_11 = arith.constant 1.000000e+00 : f32
    %14 = vector.broadcast %cst_11 : f32 to vector<8x96xf32>
    %15 = arith.addf %14, %13 : vector<8x96xf32>
    %16 = arith.divf %14, %15 : vector<8x96xf32>
    %17 = vector.extract_strided_slice %10 {offsets = [0, 96], sizes = [8, 32], strides = [1, 1]} : vector<8x128xf32> to vector<8x32xf32>
    %18 = math.tanh %17 : vector<8x32xf32>
    %19 = vector.extract_strided_slice %16 {offsets = [0, 0], sizes = [8, 32], strides = [1, 1]} : vector<8x96xf32> to vector<8x32xf32>
    %20 = vector.extract_strided_slice %16 {offsets = [0, 64], sizes = [8, 32], strides = [1, 1]} : vector<8x96xf32> to vector<8x32xf32>
    %21 = arith.mulf %19, %18 : vector<8x32xf32>
    %22 = math.tanh %21 : vector<8x32xf32>
    %23 = arith.mulf %20, %22 : vector<8x32xf32>
    %cst_12 = arith.constant 0.000000e+00 : f32
    %24 = vector.broadcast %cst_12 : f32 to vector<8x32xf32>
    %cst_13 = arith.constant 0.000000e+00 : f32
    %25 = vector.broadcast %cst_13 : f32 to vector<8x32xf32>
    %26 = arith.truncf %23 : vector<8x32xf32> to vector<8x32xbf16>
    %cst_14 = arith.constant dense<0.000000e+00> : vector<8x256xf32>
    %27 = tpu.matmul %26, %0, %cst_14 {dimension_numbers = #tpu.dot_dimension_numbers<[1], [0], [0], [1], [0, 0, 1, 1], [], []>} : vector<8x32xbf16>, vector<32x256xbf16>, vector<8x256xf32> -> vector<8x256xf32>
    %28 = vector.extract_strided_slice %27 {offsets = [0, 128], sizes = [8, 128], strides = [1, 1]} : vector<8x256xf32> to vector<8x128xf32>
    %29 = vector.broadcast %2 : vector<1x128xf32> to vector<8x128xf32>
    %30 = arith.addf %28, %29 : vector<8x128xf32>
    %31 = arith.truncf %24 : vector<8x32xf32> to vector<8x32xbf16>
    %cst_15 = arith.constant dense<0.000000e+00> : vector<8x128xf32>
    %32 = tpu.matmul %31, %1, %cst_15 {dimension_numbers = #tpu.dot_dimension_numbers<[1], [0], [0], [1], [0, 0, 1, 1], [], []>} : vector<8x32xbf16>, vector<32x128xbf16>, vector<8x128xf32> -> vector<8x128xf32>
    %33 = arith.addf %30, %32 : vector<8x128xf32>
    %34 = vector.extract_strided_slice %33 {offsets = [0, 0], sizes = [8, 96], strides = [1, 1]} : vector<8x128xf32> to vector<8x96xf32>
    %35 = arith.negf %34 : vector<8x96xf32>
    %36 = math.exp %35 : vector<8x96xf32>
    %cst_16 = arith.constant 1.000000e+00 : f32
    %37 = vector.broadcast %cst_16 : f32 to vector<8x96xf32>
    %38 = arith.addf %37, %36 : vector<8x96xf32>
    %39 = arith.divf %37, %38 : vector<8x96xf32>
    %40 = vector.extract_strided_slice %33 {offsets = [0, 96], sizes = [8, 32], strides = [1, 1]} : vector<8x128xf32> to vector<8x32xf32>
    %41 = math.tanh %40 : vector<8x32xf32>
    %42 = vector.extract_strided_slice %39 {offsets = [0, 0], sizes = [8, 32], strides = [1, 1]} : vector<8x96xf32> to vector<8x32xf32>
    %43 = vector.extract_strided_slice %39 {offsets = [0, 32], sizes = [8, 32], strides = [1, 1]} : vector<8x96xf32> to vector<8x32xf32>
    %44 = vector.extract_strided_slice %39 {offsets = [0, 64], sizes = [8, 32], strides = [1, 1]} : vector<8x96xf32> to vector<8x32xf32>
    %45 = arith.mulf %43, %25 : vector<8x32xf32>
    %46 = arith.mulf %42, %41 : vector<8x32xf32>
    %47 = arith.addf %45, %46 : vector<8x32xf32>
    %48 = math.tanh %47 : vector<8x32xf32>
    %49 = arith.mulf %44, %48 : vector<8x32xf32>
    %50 = vector.extract_strided_slice %9 {offsets = [0, 128], sizes = [8, 128], strides = [1, 1]} : vector<8x1024xf32> to vector<8x128xf32>
    %51 = vector.extract_strided_slice %27 {offsets = [0, 0], sizes = [8, 128], strides = [1, 1]} : vector<8x256xf32> to vector<8x128xf32>
    %52 = arith.addf %50, %51 : vector<8x128xf32>
    %53 = vector.extract_strided_slice %52 {offsets = [0, 0], sizes = [8, 96], strides = [1, 1]} : vector<8x128xf32> to vector<8x96xf32>
    %54 = arith.negf %53 : vector<8x96xf32>
    %55 = math.exp %54 : vector<8x96xf32>
    %cst_17 = arith.constant 1.000000e+00 : f32
    %56 = vector.broadcast %cst_17 : f32 to vector<8x96xf32>
    %57 = arith.addf %56, %55 : vector<8x96xf32>
    %58 = arith.divf %56, %57 : vector<8x96xf32>
    %59 = vector.extract_strided_slice %52 {offsets = [0, 96], sizes = [8, 32], strides = [1, 1]} : vector<8x128xf32> to vector<8x32xf32>
    %60 = math.tanh %59 : vector<8x32xf32>
    %61 = vector.extract_strided_slice %58 {offsets = [0, 0], sizes = [8, 32], strides = [1, 1]} : vector<8x96xf32> to vector<8x32xf32>
    %62 = vector.extract_strided_slice %58 {offsets = [0, 32], sizes = [8, 32], strides = [1, 1]} : vector<8x96xf32> to vector<8x32xf32>
    %63 = vector.extract_strided_slice %58 {offsets = [0, 64], sizes = [8, 32], strides = [1, 1]} : vector<8x96xf32> to vector<8x32xf32>
    %64 = arith.mulf %62, %21 : vector<8x32xf32>
    %65 = arith.mulf %61, %60 : vector<8x32xf32>
    %66 = arith.addf %64, %65 : vector<8x32xf32>
    %67 = math.tanh %66 : vector<8x32xf32>
    %68 = arith.mulf %63, %67 : vector<8x32xf32>
    %69 = arith.truncf %68 : vector<8x32xf32> to vector<8x32xbf16>
    %cst_18 = arith.constant dense<0.000000e+00> : vector<8x256xf32>
    %70 = tpu.matmul %69, %0, %cst_18 {dimension_numbers = #tpu.dot_dimension_numbers<[1], [0], [0], [1], [0, 0, 1, 1], [], []>} : vector<8x32xbf16>, vector<32x256xbf16>, vector<8x256xf32> -> vector<8x256xf32>
    %71 = vector.extract_strided_slice %70 {offsets = [0, 128], sizes = [8, 128], strides = [1, 1]} : vector<8x256xf32> to vector<8x128xf32>
    %72 = vector.broadcast %2 : vector<1x128xf32> to vector<8x128xf32>
    %73 = arith.addf %71, %72 : vector<8x128xf32>
    %74 = arith.truncf %49 : vector<8x32xf32> to vector<8x32xbf16>
    %cst_19 = arith.constant dense<0.000000e+00> : vector<8x128xf32>
    %75 = tpu.matmul %74, %1, %cst_19 {dimension_numbers = #tpu.dot_dimension_numbers<[1], [0], [0], [1], [0, 0, 1, 1], [], []>} : vector<8x32xbf16>, vector<32x128xbf16>, vector<8x128xf32> -> vector<8x128xf32>
    %76 = arith.addf %73, %75 : vector<8x128xf32>
    %77 = vector.extract_strided_slice %76 {offsets = [0, 0], sizes = [8, 96], strides = [1, 1]} : vector<8x128xf32> to vector<8x96xf32>
    %78 = arith.negf %77 : vector<8x96xf32>
    %79 = math.exp %78 : vector<8x96xf32>
    %cst_20 = arith.constant 1.000000e+00 : f32
    %80 = vector.broadcast %cst_20 : f32 to vector<8x96xf32>
    %81 = arith.addf %80, %79 : vector<8x96xf32>
    %82 = arith.divf %80, %81 : vector<8x96xf32>
    %83 = vector.extract_strided_slice %76 {offsets = [0, 96], sizes = [8, 32], strides = [1, 1]} : vector<8x128xf32> to vector<8x32xf32>
    %84 = math.tanh %83 : vector<8x32xf32>
    %85 = vector.extract_strided_slice %82 {offsets = [0, 0], sizes = [8, 32], strides = [1, 1]} : vector<8x96xf32> to vector<8x32xf32>
    %86 = vector.extract_strided_slice %82 {offsets = [0, 32], sizes = [8, 32], strides = [1, 1]} : vector<8x96xf32> to vector<8x32xf32>
    %87 = vector.extract_strided_slice %82 {offsets = [0, 64], sizes = [8, 32], strides = [1, 1]} : vector<8x96xf32> to vector<8x32xf32>
    %88 = arith.mulf %86, %47 : vector<8x32xf32>
    %89 = arith.mulf %85, %84 : vector<8x32xf32>
    %90 = arith.addf %88, %89 : vector<8x32xf32>
    %91 = math.tanh %90 : vector<8x32xf32>
    %92 = arith.mulf %87, %91 : vector<8x32xf32>
    %93 = vector.extract_strided_slice %9 {offsets = [0, 256], sizes = [8, 128], strides = [1, 1]} : vector<8x1024xf32> to vector<8x128xf32>
    %94 = vector.extract_strided_slice %70 {offsets = [0, 0], sizes = [8, 128], strides = [1, 1]} : vector<8x256xf32> to vector<8x128xf32>
    %95 = arith.addf %93, %94 : vector<8x128xf32>
    %96 = vector.extract_strided_slice %95 {offsets = [0, 0], sizes = [8, 96], strides = [1, 1]} : vector<8x128xf32> to vector<8x96xf32>
    %97 = arith.negf %96 : vector<8x96xf32>
    %98 = math.exp %97 : vector<8x96xf32>
    %cst_21 = arith.constant 1.000000e+00 : f32
    %99 = vector.broadcast %cst_21 : f32 to vector<8x96xf32>
    %100 = arith.addf %99, %98 : vector<8x96xf32>
    %101 = arith.divf %99, %100 : vector<8x96xf32>
    %102 = vector.extract_strided_slice %95 {offsets = [0, 96], sizes = [8, 32], strides = [1, 1]} : vector<8x128xf32> to vector<8x32xf32>
    %103 = math.tanh %102 : vector<8x32xf32>
    %104 = vector.extract_strided_slice %101 {offsets = [0, 0], sizes = [8, 32], strides = [1, 1]} : vector<8x96xf32> to vector<8x32xf32>
    %105 = vector.extract_strided_slice %101 {offsets = [0, 32], sizes = [8, 32], strides = [1, 1]} : vector<8x96xf32> to vector<8x32xf32>
    %106 = vector.extract_strided_slice %101 {offsets = [0, 64], sizes = [8, 32], strides = [1, 1]} : vector<8x96xf32> to vector<8x32xf32>
    %107 = arith.mulf %105, %66 : vector<8x32xf32>
    %108 = arith.mulf %104, %103 : vector<8x32xf32>
    %109 = arith.addf %107, %108 : vector<8x32xf32>
    %110 = math.tanh %109 : vector<8x32xf32>
    %111 = arith.mulf %106, %110 : vector<8x32xf32>
    %112 = arith.truncf %111 : vector<8x32xf32> to vector<8x32xbf16>
    %cst_22 = arith.constant dense<0.000000e+00> : vector<8x256xf32>
    %113 = tpu.matmul %112, %0, %cst_22 {dimension_numbers = #tpu.dot_dimension_numbers<[1], [0], [0], [1], [0, 0, 1, 1], [], []>} : vector<8x32xbf16>, vector<32x256xbf16>, vector<8x256xf32> -> vector<8x256xf32>
    %114 = vector.extract_strided_slice %113 {offsets = [0, 128], sizes = [8, 128], strides = [1, 1]} : vector<8x256xf32> to vector<8x128xf32>
    %115 = vector.broadcast %2 : vector<1x128xf32> to vector<8x128xf32>
    %116 = arith.addf %114, %115 : vector<8x128xf32>
    %117 = arith.truncf %92 : vector<8x32xf32> to vector<8x32xbf16>
    %cst_23 = arith.constant dense<0.000000e+00> : vector<8x128xf32>
    %118 = tpu.matmul %117, %1, %cst_23 {dimension_numbers = #tpu.dot_dimension_numbers<[1], [0], [0], [1], [0, 0, 1, 1], [], []>} : vector<8x32xbf16>, vector<32x128xbf16>, vector<8x128xf32> -> vector<8x128xf32>
    %119 = arith.addf %116, %118 : vector<8x128xf32>
    %120 = vector.extract_strided_slice %119 {offsets = [0, 0], sizes = [8, 96], strides = [1, 1]} : vector<8x128xf32> to vector<8x96xf32>
    %121 = arith.negf %120 : vector<8x96xf32>
    %122 = math.exp %121 : vector<8x96xf32>
    %cst_24 = arith.constant 1.000000e+00 : f32
    %123 = vector.broadcast %cst_24 : f32 to vector<8x96xf32>
    %124 = arith.addf %123, %122 : vector<8x96xf32>
    %125 = arith.divf %123, %124 : vector<8x96xf32>
    %126 = vector.extract_strided_slice %119 {offsets = [0, 96], sizes = [8, 32], strides = [1, 1]} : vector<8x128xf32> to vector<8x32xf32>
    %127 = math.tanh %126 : vector<8x32xf32>
    %128 = vector.extract_strided_slice %125 {offsets = [0, 0], sizes = [8, 32], strides = [1, 1]} : vector<8x96xf32> to vector<8x32xf32>
    %129 = vector.extract_strided_slice %125 {offsets = [0, 32], sizes = [8, 32], strides = [1, 1]} : vector<8x96xf32> to vector<8x32xf32>
    %130 = vector.extract_strided_slice %125 {offsets = [0, 64], sizes = [8, 32], strides = [1, 1]} : vector<8x96xf32> to vector<8x32xf32>
    %131 = arith.mulf %129, %90 : vector<8x32xf32>
    %132 = arith.mulf %128, %127 : vector<8x32xf32>
    %133 = arith.addf %131, %132 : vector<8x32xf32>
    %134 = math.tanh %133 : vector<8x32xf32>
    %135 = arith.mulf %130, %134 : vector<8x32xf32>
    %136 = vector.extract_strided_slice %9 {offsets = [0, 384], sizes = [8, 128], strides = [1, 1]} : vector<8x1024xf32> to vector<8x128xf32>
    %137 = vector.extract_strided_slice %113 {offsets = [0, 0], sizes = [8, 128], strides = [1, 1]} : vector<8x256xf32> to vector<8x128xf32>
    %138 = arith.addf %136, %137 : vector<8x128xf32>
    %139 = vector.extract_strided_slice %138 {offsets = [0, 0], sizes = [8, 96], strides = [1, 1]} : vector<8x128xf32> to vector<8x96xf32>
    %140 = arith.negf %139 : vector<8x96xf32>
    %141 = math.exp %140 : vector<8x96xf32>
    %cst_25 = arith.constant 1.000000e+00 : f32
    %142 = vector.broadcast %cst_25 : f32 to vector<8x96xf32>
    %143 = arith.addf %142, %141 : vector<8x96xf32>
    %144 = arith.divf %142, %143 : vector<8x96xf32>
    %145 = vector.extract_strided_slice %138 {offsets = [0, 96], sizes = [8, 32], strides = [1, 1]} : vector<8x128xf32> to vector<8x32xf32>
    %146 = math.tanh %145 : vector<8x32xf32>
    %147 = vector.extract_strided_slice %144 {offsets = [0, 0], sizes = [8, 32], strides = [1, 1]} : vector<8x96xf32> to vector<8x32xf32>
    %148 = vector.extract_strided_slice %144 {offsets = [0, 32], sizes = [8, 32], strides = [1, 1]} : vector<8x96xf32> to vector<8x32xf32>
    %149 = vector.extract_strided_slice %144 {offsets = [0, 64], sizes = [8, 32], strides = [1, 1]} : vector<8x96xf32> to vector<8x32xf32>
    %150 = arith.mulf %148, %109 : vector<8x32xf32>
    %151 = arith.mulf %147, %146 : vector<8x32xf32>
    %152 = arith.addf %150, %151 : vector<8x32xf32>
    %153 = math.tanh %152 : vector<8x32xf32>
    %154 = arith.mulf %149, %153 : vector<8x32xf32>
    %155 = arith.truncf %154 : vector<8x32xf32> to vector<8x32xbf16>
    %cst_26 = arith.constant dense<0.000000e+00> : vector<8x256xf32>
    %156 = tpu.matmul %155, %0, %cst_26 {dimension_numbers = #tpu.dot_dimension_numbers<[1], [0], [0], [1], [0, 0, 1, 1], [], []>} : vector<8x32xbf16>, vector<32x256xbf16>, vector<8x256xf32> -> vector<8x256xf32>
    %157 = vector.extract_strided_slice %156 {offsets = [0, 128], sizes = [8, 128], strides = [1, 1]} : vector<8x256xf32> to vector<8x128xf32>
    %158 = vector.broadcast %2 : vector<1x128xf32> to vector<8x128xf32>
    %159 = arith.addf %157, %158 : vector<8x128xf32>
    %160 = arith.truncf %135 : vector<8x32xf32> to vector<8x32xbf16>
    %cst_27 = arith.constant dense<0.000000e+00> : vector<8x128xf32>
    %161 = tpu.matmul %160, %1, %cst_27 {dimension_numbers = #tpu.dot_dimension_numbers<[1], [0], [0], [1], [0, 0, 1, 1], [], []>} : vector<8x32xbf16>, vector<32x128xbf16>, vector<8x128xf32> -> vector<8x128xf32>
    %162 = arith.addf %159, %161 : vector<8x128xf32>
    %163 = vector.extract_strided_slice %162 {offsets = [0, 0], sizes = [8, 96], strides = [1, 1]} : vector<8x128xf32> to vector<8x96xf32>
    %164 = arith.negf %163 : vector<8x96xf32>
    %165 = math.exp %164 : vector<8x96xf32>
    %cst_28 = arith.constant 1.000000e+00 : f32
    %166 = vector.broadcast %cst_28 : f32 to vector<8x96xf32>
    %167 = arith.addf %166, %165 : vector<8x96xf32>
    %168 = arith.divf %166, %167 : vector<8x96xf32>
    %169 = vector.extract_strided_slice %162 {offsets = [0, 96], sizes = [8, 32], strides = [1, 1]} : vector<8x128xf32> to vector<8x32xf32>
    %170 = math.tanh %169 : vector<8x32xf32>
    %171 = vector.extract_strided_slice %168 {offsets = [0, 0], sizes = [8, 32], strides = [1, 1]} : vector<8x96xf32> to vector<8x32xf32>
    %172 = vector.extract_strided_slice %168 {offsets = [0, 32], sizes = [8, 32], strides = [1, 1]} : vector<8x96xf32> to vector<8x32xf32>
    %173 = vector.extract_strided_slice %168 {offsets = [0, 64], sizes = [8, 32], strides = [1, 1]} : vector<8x96xf32> to vector<8x32xf32>
    %174 = arith.mulf %172, %133 : vector<8x32xf32>
    %175 = arith.mulf %171, %170 : vector<8x32xf32>
    %176 = arith.addf %174, %175 : vector<8x32xf32>
    %177 = math.tanh %176 : vector<8x32xf32>
    %178 = arith.mulf %173, %177 : vector<8x32xf32>
    %179 = vector.extract_strided_slice %9 {offsets = [0, 512], sizes = [8, 128], strides = [1, 1]} : vector<8x1024xf32> to vector<8x128xf32>
    %180 = vector.extract_strided_slice %156 {offsets = [0, 0], sizes = [8, 128], strides = [1, 1]} : vector<8x256xf32> to vector<8x128xf32>
    %181 = arith.addf %179, %180 : vector<8x128xf32>
    %182 = vector.extract_strided_slice %181 {offsets = [0, 0], sizes = [8, 96], strides = [1, 1]} : vector<8x128xf32> to vector<8x96xf32>
    %183 = arith.negf %182 : vector<8x96xf32>
    %184 = math.exp %183 : vector<8x96xf32>
    %cst_29 = arith.constant 1.000000e+00 : f32
    %185 = vector.broadcast %cst_29 : f32 to vector<8x96xf32>
    %186 = arith.addf %185, %184 : vector<8x96xf32>
    %187 = arith.divf %185, %186 : vector<8x96xf32>
    %188 = vector.extract_strided_slice %181 {offsets = [0, 96], sizes = [8, 32], strides = [1, 1]} : vector<8x128xf32> to vector<8x32xf32>
    %189 = math.tanh %188 : vector<8x32xf32>
    %190 = vector.extract_strided_slice %187 {offsets = [0, 0], sizes = [8, 32], strides = [1, 1]} : vector<8x96xf32> to vector<8x32xf32>
    %191 = vector.extract_strided_slice %187 {offsets = [0, 32], sizes = [8, 32], strides = [1, 1]} : vector<8x96xf32> to vector<8x32xf32>
    %192 = vector.extract_strided_slice %187 {offsets = [0, 64], sizes = [8, 32], strides = [1, 1]} : vector<8x96xf32> to vector<8x32xf32>
    %193 = arith.mulf %191, %152 : vector<8x32xf32>
    %194 = arith.mulf %190, %189 : vector<8x32xf32>
    %195 = arith.addf %193, %194 : vector<8x32xf32>
    %196 = math.tanh %195 : vector<8x32xf32>
    %197 = arith.mulf %192, %196 : vector<8x32xf32>
    %198 = arith.truncf %197 : vector<8x32xf32> to vector<8x32xbf16>
    %cst_30 = arith.constant dense<0.000000e+00> : vector<8x256xf32>
    %199 = tpu.matmul %198, %0, %cst_30 {dimension_numbers = #tpu.dot_dimension_numbers<[1], [0], [0], [1], [0, 0, 1, 1], [], []>} : vector<8x32xbf16>, vector<32x256xbf16>, vector<8x256xf32> -> vector<8x256xf32>
    %200 = vector.extract_strided_slice %199 {offsets = [0, 128], sizes = [8, 128], strides = [1, 1]} : vector<8x256xf32> to vector<8x128xf32>
    %201 = vector.broadcast %2 : vector<1x128xf32> to vector<8x128xf32>
    %202 = arith.addf %200, %201 : vector<8x128xf32>
    %203 = arith.truncf %178 : vector<8x32xf32> to vector<8x32xbf16>
    %cst_31 = arith.constant dense<0.000000e+00> : vector<8x128xf32>
    %204 = tpu.matmul %203, %1, %cst_31 {dimension_numbers = #tpu.dot_dimension_numbers<[1], [0], [0], [1], [0, 0, 1, 1], [], []>} : vector<8x32xbf16>, vector<32x128xbf16>, vector<8x128xf32> -> vector<8x128xf32>
    %205 = arith.addf %202, %204 : vector<8x128xf32>
    %206 = vector.extract_strided_slice %205 {offsets = [0, 0], sizes = [8, 96], strides = [1, 1]} : vector<8x128xf32> to vector<8x96xf32>
    %207 = arith.negf %206 : vector<8x96xf32>
    %208 = math.exp %207 : vector<8x96xf32>
    %cst_32 = arith.constant 1.000000e+00 : f32
    %209 = vector.broadcast %cst_32 : f32 to vector<8x96xf32>
    %210 = arith.addf %209, %208 : vector<8x96xf32>
    %211 = arith.divf %209, %210 : vector<8x96xf32>
    %212 = vector.extract_strided_slice %205 {offsets = [0, 96], sizes = [8, 32], strides = [1, 1]} : vector<8x128xf32> to vector<8x32xf32>
    %213 = math.tanh %212 : vector<8x32xf32>
    %214 = vector.extract_strided_slice %211 {offsets = [0, 0], sizes = [8, 32], strides = [1, 1]} : vector<8x96xf32> to vector<8x32xf32>
    %215 = vector.extract_strided_slice %211 {offsets = [0, 32], sizes = [8, 32], strides = [1, 1]} : vector<8x96xf32> to vector<8x32xf32>
    %216 = vector.extract_strided_slice %211 {offsets = [0, 64], sizes = [8, 32], strides = [1, 1]} : vector<8x96xf32> to vector<8x32xf32>
    %217 = arith.mulf %215, %176 : vector<8x32xf32>
    %218 = arith.mulf %214, %213 : vector<8x32xf32>
    %219 = arith.addf %217, %218 : vector<8x32xf32>
    %220 = math.tanh %219 : vector<8x32xf32>
    %221 = arith.mulf %216, %220 : vector<8x32xf32>
    %222 = vector.extract_strided_slice %9 {offsets = [0, 640], sizes = [8, 128], strides = [1, 1]} : vector<8x1024xf32> to vector<8x128xf32>
    %223 = vector.extract_strided_slice %199 {offsets = [0, 0], sizes = [8, 128], strides = [1, 1]} : vector<8x256xf32> to vector<8x128xf32>
    %224 = arith.addf %222, %223 : vector<8x128xf32>
    %225 = vector.extract_strided_slice %224 {offsets = [0, 0], sizes = [8, 96], strides = [1, 1]} : vector<8x128xf32> to vector<8x96xf32>
    %226 = arith.negf %225 : vector<8x96xf32>
    %227 = math.exp %226 : vector<8x96xf32>
    %cst_33 = arith.constant 1.000000e+00 : f32
    %228 = vector.broadcast %cst_33 : f32 to vector<8x96xf32>
    %229 = arith.addf %228, %227 : vector<8x96xf32>
    %230 = arith.divf %228, %229 : vector<8x96xf32>
    %231 = vector.extract_strided_slice %224 {offsets = [0, 96], sizes = [8, 32], strides = [1, 1]} : vector<8x128xf32> to vector<8x32xf32>
    %232 = math.tanh %231 : vector<8x32xf32>
    %233 = vector.extract_strided_slice %230 {offsets = [0, 0], sizes = [8, 32], strides = [1, 1]} : vector<8x96xf32> to vector<8x32xf32>
    %234 = vector.extract_strided_slice %230 {offsets = [0, 32], sizes = [8, 32], strides = [1, 1]} : vector<8x96xf32> to vector<8x32xf32>
    %235 = vector.extract_strided_slice %230 {offsets = [0, 64], sizes = [8, 32], strides = [1, 1]} : vector<8x96xf32> to vector<8x32xf32>
    %236 = arith.mulf %234, %195 : vector<8x32xf32>
    %237 = arith.mulf %233, %232 : vector<8x32xf32>
    %238 = arith.addf %236, %237 : vector<8x32xf32>
    %239 = math.tanh %238 : vector<8x32xf32>
    %240 = arith.mulf %235, %239 : vector<8x32xf32>
    %241 = arith.truncf %240 : vector<8x32xf32> to vector<8x32xbf16>
    %cst_34 = arith.constant dense<0.000000e+00> : vector<8x256xf32>
    %242 = tpu.matmul %241, %0, %cst_34 {dimension_numbers = #tpu.dot_dimension_numbers<[1], [0], [0], [1], [0, 0, 1, 1], [], []>} : vector<8x32xbf16>, vector<32x256xbf16>, vector<8x256xf32> -> vector<8x256xf32>
    %243 = vector.extract_strided_slice %242 {offsets = [0, 128], sizes = [8, 128], strides = [1, 1]} : vector<8x256xf32> to vector<8x128xf32>
    %244 = vector.broadcast %2 : vector<1x128xf32> to vector<8x128xf32>
    %245 = arith.addf %243, %244 : vector<8x128xf32>
    %246 = arith.truncf %221 : vector<8x32xf32> to vector<8x32xbf16>
    %cst_35 = arith.constant dense<0.000000e+00> : vector<8x128xf32>
    %247 = tpu.matmul %246, %1, %cst_35 {dimension_numbers = #tpu.dot_dimension_numbers<[1], [0], [0], [1], [0, 0, 1, 1], [], []>} : vector<8x32xbf16>, vector<32x128xbf16>, vector<8x128xf32> -> vector<8x128xf32>
    %248 = arith.addf %245, %247 : vector<8x128xf32>
    %249 = vector.extract_strided_slice %248 {offsets = [0, 0], sizes = [8, 96], strides = [1, 1]} : vector<8x128xf32> to vector<8x96xf32>
    %250 = arith.negf %249 : vector<8x96xf32>
    %251 = math.exp %250 : vector<8x96xf32>
    %cst_36 = arith.constant 1.000000e+00 : f32
    %252 = vector.broadcast %cst_36 : f32 to vector<8x96xf32>
    %253 = arith.addf %252, %251 : vector<8x96xf32>
    %254 = arith.divf %252, %253 : vector<8x96xf32>
    %255 = vector.extract_strided_slice %248 {offsets = [0, 96], sizes = [8, 32], strides = [1, 1]} : vector<8x128xf32> to vector<8x32xf32>
    %256 = math.tanh %255 : vector<8x32xf32>
    %257 = vector.extract_strided_slice %254 {offsets = [0, 0], sizes = [8, 32], strides = [1, 1]} : vector<8x96xf32> to vector<8x32xf32>
    %258 = vector.extract_strided_slice %254 {offsets = [0, 32], sizes = [8, 32], strides = [1, 1]} : vector<8x96xf32> to vector<8x32xf32>
    %259 = vector.extract_strided_slice %254 {offsets = [0, 64], sizes = [8, 32], strides = [1, 1]} : vector<8x96xf32> to vector<8x32xf32>
    %260 = arith.mulf %258, %219 : vector<8x32xf32>
    %261 = arith.mulf %257, %256 : vector<8x32xf32>
    %262 = arith.addf %260, %261 : vector<8x32xf32>
    %263 = math.tanh %262 : vector<8x32xf32>
    %264 = arith.mulf %259, %263 : vector<8x32xf32>
    %265 = vector.extract_strided_slice %9 {offsets = [0, 768], sizes = [8, 128], strides = [1, 1]} : vector<8x1024xf32> to vector<8x128xf32>
    %266 = vector.extract_strided_slice %242 {offsets = [0, 0], sizes = [8, 128], strides = [1, 1]} : vector<8x256xf32> to vector<8x128xf32>
    %267 = arith.addf %265, %266 : vector<8x128xf32>
    %268 = vector.extract_strided_slice %267 {offsets = [0, 0], sizes = [8, 96], strides = [1, 1]} : vector<8x128xf32> to vector<8x96xf32>
    %269 = arith.negf %268 : vector<8x96xf32>
    %270 = math.exp %269 : vector<8x96xf32>
    %cst_37 = arith.constant 1.000000e+00 : f32
    %271 = vector.broadcast %cst_37 : f32 to vector<8x96xf32>
    %272 = arith.addf %271, %270 : vector<8x96xf32>
    %273 = arith.divf %271, %272 : vector<8x96xf32>
    %274 = vector.extract_strided_slice %267 {offsets = [0, 96], sizes = [8, 32], strides = [1, 1]} : vector<8x128xf32> to vector<8x32xf32>
    %275 = math.tanh %274 : vector<8x32xf32>
    %276 = vector.extract_strided_slice %273 {offsets = [0, 0], sizes = [8, 32], strides = [1, 1]} : vector<8x96xf32> to vector<8x32xf32>
    %277 = vector.extract_strided_slice %273 {offsets = [0, 32], sizes = [8, 32], strides = [1, 1]} : vector<8x96xf32> to vector<8x32xf32>
    %278 = vector.extract_strided_slice %273 {offsets = [0, 64], sizes = [8, 32], strides = [1, 1]} : vector<8x96xf32> to vector<8x32xf32>
    %279 = arith.mulf %277, %238 : vector<8x32xf32>
    %280 = arith.mulf %276, %275 : vector<8x32xf32>
    %281 = arith.addf %279, %280 : vector<8x32xf32>
    %282 = math.tanh %281 : vector<8x32xf32>
    %283 = arith.mulf %278, %282 : vector<8x32xf32>
    %284 = arith.truncf %283 : vector<8x32xf32> to vector<8x32xbf16>
    %cst_38 = arith.constant dense<0.000000e+00> : vector<8x256xf32>
    %285 = tpu.matmul %284, %0, %cst_38 {dimension_numbers = #tpu.dot_dimension_numbers<[1], [0], [0], [1], [0, 0, 1, 1], [], []>} : vector<8x32xbf16>, vector<32x256xbf16>, vector<8x256xf32> -> vector<8x256xf32>
    %286 = vector.extract_strided_slice %285 {offsets = [0, 128], sizes = [8, 128], strides = [1, 1]} : vector<8x256xf32> to vector<8x128xf32>
    %287 = vector.broadcast %2 : vector<1x128xf32> to vector<8x128xf32>
    %288 = arith.addf %286, %287 : vector<8x128xf32>
    %289 = arith.truncf %264 : vector<8x32xf32> to vector<8x32xbf16>
    %cst_39 = arith.constant dense<0.000000e+00> : vector<8x128xf32>
    %290 = tpu.matmul %289, %1, %cst_39 {dimension_numbers = #tpu.dot_dimension_numbers<[1], [0], [0], [1], [0, 0, 1, 1], [], []>} : vector<8x32xbf16>, vector<32x128xbf16>, vector<8x128xf32> -> vector<8x128xf32>
    %291 = arith.addf %288, %290 : vector<8x128xf32>
    %292 = vector.extract_strided_slice %291 {offsets = [0, 0], sizes = [8, 96], strides = [1, 1]} : vector<8x128xf32> to vector<8x96xf32>
    %293 = arith.negf %292 : vector<8x96xf32>
    %294 = math.exp %293 : vector<8x96xf32>
    %cst_40 = arith.constant 1.000000e+00 : f32
    %295 = vector.broadcast %cst_40 : f32 to vector<8x96xf32>
    %296 = arith.addf %295, %294 : vector<8x96xf32>
    %297 = arith.divf %295, %296 : vector<8x96xf32>
    %298 = vector.extract_strided_slice %291 {offsets = [0, 96], sizes = [8, 32], strides = [1, 1]} : vector<8x128xf32> to vector<8x32xf32>
    %299 = math.tanh %298 : vector<8x32xf32>
    %300 = vector.extract_strided_slice %297 {offsets = [0, 0], sizes = [8, 32], strides = [1, 1]} : vector<8x96xf32> to vector<8x32xf32>
    %301 = vector.extract_strided_slice %297 {offsets = [0, 32], sizes = [8, 32], strides = [1, 1]} : vector<8x96xf32> to vector<8x32xf32>
    %302 = vector.extract_strided_slice %297 {offsets = [0, 64], sizes = [8, 32], strides = [1, 1]} : vector<8x96xf32> to vector<8x32xf32>
    %303 = arith.mulf %301, %262 : vector<8x32xf32>
    %304 = arith.mulf %300, %299 : vector<8x32xf32>
    %305 = arith.addf %303, %304 : vector<8x32xf32>
    %306 = math.tanh %305 : vector<8x32xf32>
    %307 = arith.mulf %302, %306 : vector<8x32xf32>
    %308 = vector.extract_strided_slice %9 {offsets = [0, 896], sizes = [8, 128], strides = [1, 1]} : vector<8x1024xf32> to vector<8x128xf32>
    %309 = vector.extract_strided_slice %285 {offsets = [0, 0], sizes = [8, 128], strides = [1, 1]} : vector<8x256xf32> to vector<8x128xf32>
    %310 = arith.addf %308, %309 : vector<8x128xf32>
    %311 = vector.extract_strided_slice %310 {offsets = [0, 0], sizes = [8, 96], strides = [1, 1]} : vector<8x128xf32> to vector<8x96xf32>
    %312 = arith.negf %311 : vector<8x96xf32>
    %313 = math.exp %312 : vector<8x96xf32>
    %cst_41 = arith.constant 1.000000e+00 : f32
    %314 = vector.broadcast %cst_41 : f32 to vector<8x96xf32>
    %315 = arith.addf %314, %313 : vector<8x96xf32>
    %316 = arith.divf %314, %315 : vector<8x96xf32>
    %317 = vector.extract_strided_slice %310 {offsets = [0, 96], sizes = [8, 32], strides = [1, 1]} : vector<8x128xf32> to vector<8x32xf32>
    %318 = math.tanh %317 : vector<8x32xf32>
    %319 = vector.extract_strided_slice %316 {offsets = [0, 0], sizes = [8, 32], strides = [1, 1]} : vector<8x96xf32> to vector<8x32xf32>
    %320 = vector.extract_strided_slice %316 {offsets = [0, 32], sizes = [8, 32], strides = [1, 1]} : vector<8x96xf32> to vector<8x32xf32>
    %321 = vector.extract_strided_slice %316 {offsets = [0, 64], sizes = [8, 32], strides = [1, 1]} : vector<8x96xf32> to vector<8x32xf32>
    %322 = arith.mulf %320, %281 : vector<8x32xf32>
    %323 = arith.mulf %319, %318 : vector<8x32xf32>
    %324 = arith.addf %322, %323 : vector<8x32xf32>
    %325 = math.tanh %324 : vector<8x32xf32>
    %326 = arith.mulf %321, %325 : vector<8x32xf32>
    %327 = arith.truncf %326 : vector<8x32xf32> to vector<8x32xbf16>
    %cst_42 = arith.constant dense<0.000000e+00> : vector<8x256xf32>
    %328 = tpu.matmul %327, %0, %cst_42 {dimension_numbers = #tpu.dot_dimension_numbers<[1], [0], [0], [1], [0, 0, 1, 1], [], []>} : vector<8x32xbf16>, vector<32x256xbf16>, vector<8x256xf32> -> vector<8x256xf32>
    %329 = vector.extract_strided_slice %328 {offsets = [0, 128], sizes = [8, 128], strides = [1, 1]} : vector<8x256xf32> to vector<8x128xf32>
    %330 = vector.broadcast %2 : vector<1x128xf32> to vector<8x128xf32>
    %331 = arith.addf %329, %330 : vector<8x128xf32>
    %332 = arith.truncf %307 : vector<8x32xf32> to vector<8x32xbf16>
    %cst_43 = arith.constant dense<0.000000e+00> : vector<8x128xf32>
    %333 = tpu.matmul %332, %1, %cst_43 {dimension_numbers = #tpu.dot_dimension_numbers<[1], [0], [0], [1], [0, 0, 1, 1], [], []>} : vector<8x32xbf16>, vector<32x128xbf16>, vector<8x128xf32> -> vector<8x128xf32>
    %334 = arith.addf %331, %333 : vector<8x128xf32>
    %335 = vector.extract_strided_slice %334 {offsets = [0, 0], sizes = [8, 96], strides = [1, 1]} : vector<8x128xf32> to vector<8x96xf32>
    %336 = arith.negf %335 : vector<8x96xf32>
    %337 = math.exp %336 : vector<8x96xf32>
    %cst_44 = arith.constant 1.000000e+00 : f32
    %338 = vector.broadcast %cst_44 : f32 to vector<8x96xf32>
    %339 = arith.addf %338, %337 : vector<8x96xf32>
    %340 = arith.divf %338, %339 : vector<8x96xf32>
    %341 = vector.extract_strided_slice %334 {offsets = [0, 96], sizes = [8, 32], strides = [1, 1]} : vector<8x128xf32> to vector<8x32xf32>
    %342 = math.tanh %341 : vector<8x32xf32>
    %343 = vector.extract_strided_slice %340 {offsets = [0, 0], sizes = [8, 32], strides = [1, 1]} : vector<8x96xf32> to vector<8x32xf32>
    %344 = vector.extract_strided_slice %340 {offsets = [0, 32], sizes = [8, 32], strides = [1, 1]} : vector<8x96xf32> to vector<8x32xf32>
    %345 = vector.extract_strided_slice %340 {offsets = [0, 64], sizes = [8, 32], strides = [1, 1]} : vector<8x96xf32> to vector<8x32xf32>
    %346 = arith.mulf %344, %305 : vector<8x32xf32>
    %347 = arith.mulf %343, %342 : vector<8x32xf32>
    %348 = arith.addf %346, %347 : vector<8x32xf32>
    %349 = math.tanh %348 : vector<8x32xf32>
    %350 = arith.mulf %345, %349 : vector<8x32xf32>
    %351 = arith.truncf %350 : vector<8x32xf32> to vector<8x32xbf16>
    %c0_45 = arith.constant 0 : index
    %c0_46 = arith.constant 0 : index
    %352 = vector.load %arg7[%c0_45, %c0_46] : memref<32x128xbf16, #tpu.memory_space<vmem>>, vector<32x128xbf16>
    %cst_47 = arith.constant dense<0.000000e+00> : vector<8x128xf32>
    %353 = tpu.matmul %351, %352, %cst_47 {dimension_numbers = #tpu.dot_dimension_numbers<[1], [0], [0], [1], [0, 0, 1, 1], [], []>} : vector<8x32xbf16>, vector<32x128xbf16>, vector<8x128xf32> -> vector<8x128xf32>
    %c0_48 = arith.constant 0 : index
    %c0_49 = arith.constant 0 : index
    %354 = vector.load %arg8[%c0_48, %c0_49] : memref<1x128xf32, #tpu.memory_space<vmem>>, vector<1x128xf32>
    %355 = vector.broadcast %354 : vector<1x128xf32> to vector<8x128xf32>
    %356 = arith.addf %353, %355 : vector<8x128xf32>
    %c0_50 = arith.constant 0 : index
    %c0_51 = arith.constant 0 : index
    %357 = vector.load %arg9[%c0_50, %c0_51] : memref<8x128xf32, #tpu.memory_space<vmem>>, vector<8x128xf32>
    tpu.vector_store %arg9[%c0_50, %c0_51], %356 {strides = array<i32>} : memref<8x128xf32, #tpu.memory_space<vmem>>, vector<8x128xf32>,
    return
  }
  func.func @transform_0(%arg0: i32) -> (i32, i32) {
    %c0_i32 = arith.constant 0 : i32
    %c0_i32_0 = arith.constant 0 : i32
    %c0_i32_1 = arith.constant 0 : i32
    return %c0_i32, %c0_i32_0 : i32, i32
  }
  func.func @transform_1(%arg0: i32) -> (i32, i32) {
    %c0_i32 = arith.constant 0 : i32
    %c0_i32_0 = arith.constant 0 : i32
    %c0_i32_1 = arith.constant 0 : i32
    return %c0_i32, %c0_i32_0 : i32, i32
  }
  func.func @transform_2(%arg0: i32) -> (i32, i32) {
    %c0_i32 = arith.constant 0 : i32
    %c0_i32_0 = arith.constant 0 : i32
    %c0_i32_1 = arith.constant 0 : i32
    return %c0_i32, %c0_i32_0 : i32, i32
  }
  func.func @transform_3(%arg0: i32) -> (i32, i32) {
    %c0_i32 = arith.constant 0 : i32
    %c0_i32_0 = arith.constant 0 : i32
    %c0_i32_1 = arith.constant 0 : i32
    return %c0_i32, %c0_i32_0 : i32, i32
  }
  func.func @transform_4(%arg0: i32) -> (i32, i32) {
    %c0_i32 = arith.constant 0 : i32
    %c0_i32_0 = arith.constant 0 : i32
    %c0_i32_1 = arith.constant 0 : i32
    return %c0_i32, %c0_i32_0 : i32, i32
  }
  func.func @transform_5(%arg0: i32) -> (i32, i32) {
    %c0_i32 = arith.constant 0 : i32
    %c0_i32_0 = arith.constant 0 : i32
    %c0_i32_1 = arith.constant 0 : i32
    return %c0_i32, %c0_i32_0 : i32, i32
  }
  func.func @transform_6(%arg0: i32) -> (i32, i32) {
    %c0_i32 = arith.constant 0 : i32
    %c0_i32_0 = arith.constant 0 : i32
    %c0_i32_1 = arith.constant 0 : i32
    return %c0_i32, %c0_i32_0 : i32, i32
  }
  func.func @transform_7(%arg0: i32) -> (i32, i32) {
    %c0_i32 = arith.constant 0 : i32
    %c0_i32_0 = arith.constant 0 : i32
    %c0_i32_1 = arith.constant 0 : i32
    return %c0_i32, %c0_i32_0 : i32, i32
  }
  func.func @transform_8(%arg0: i32) -> (i32, i32) {
    %c0_i32 = arith.constant 0 : i32
    %c0_i32_0 = arith.constant 0 : i32
    %c0_i32_1 = arith.constant 0 : i32
    return %c0_i32, %c0_i32_0 : i32, i32
  }
}

</mosaic_0001>

<llo_original>
// kernel: forward.1
$region0: #{forward.1}
  #allocation0 [shape = 'u32[]', space=smem, size = 0x4, offset = 0x4, fixed_abs, tag = 'smem constant byte address 0x4 - core index']
  #allocation1 [shape = 'u32[144,128]{1,0:T(1,128)}', space=vmem, size = 0x12000, scoped, tag = 'internal scratch']
  %s0 = inlined_call_operand.vmem [shape: f32[8,128], index: 0, kind: input, shape index: {}]
  %s1 = inlined_call_operand.vmem [shape: bf16[128,1024], index: 1, kind: input, shape index: {}]
  %s2 = inlined_call_operand.vmem [shape: f32[1,1024], index: 2, kind: input, shape index: {}]
  %s3 = inlined_call_operand.vmem [shape: bf16[32,256], index: 3, kind: input, shape index: {}]
  %s4 = inlined_call_operand.vmem [shape: bf16[32,128], index: 4, kind: input, shape index: {}]
  %s5 = inlined_call_operand.vmem [shape: f32[1,128], index: 5, kind: input, shape index: {}]
  %s6 = inlined_call_operand.vmem [shape: bf16[32,128], index: 6, kind: input, shape index: {}]
  %s7 = inlined_call_operand.vmem [shape: f32[1,128], index: 7, kind: input, shape index: {}]
  %s8 = inlined_call_operand.vmem [shape: f32[8,128], index: 8, kind: output, shape index: {}]
  %s9 = sld [smem:[#allocation0]]
  $region42: #{forward.1} parent=0
    _
  %s11 = ssub.s32 1, %s9
  %s12 = scalar_select 0, %s11, %s9
  // Predicated region
  $region2: #{forward.1} parent=0 // pred_check
    _
  $region3: #{forward.1} parent=0 // pred_check_branch
    %14 = sbr.rel (0) target = $region5
  $region4: #{forward.1} parent=0 // pred_region
    _
  $region5: #{forward.1} parent=0 // pred_fallthru
    _
  // Predicated region
  $region6: #{forward.1} parent=0 // pred_check
    _
  $region7: #{forward.1} parent=0 // pred_check_branch
    %16 = sbr.rel (0) target = $region9
  $region8: #{forward.1} parent=0 // pred_region
    _
  $region9: #{forward.1} parent=0 // pred_fallthru
    _
  // Predicated region
  $region10: #{forward.1} parent=0 // pred_check
    _
  $region11: #{forward.1} parent=0 // pred_check_branch
    %18 = sbr.rel (0) target = $region13
  $region12: #{forward.1} parent=0 // pred_region
    _
  $region13: #{forward.1} parent=0 // pred_fallthru
    _
  // Predicated region
  $region14: #{forward.1} parent=0 // pred_check
    _
  $region15: #{forward.1} parent=0 // pred_check_branch
    %20 = sbr.rel (0) target = $region17
  $region16: #{forward.1} parent=0 // pred_region
    _
  $region17: #{forward.1} parent=0 // pred_fallthru
    _
  // Predicated region
  $region18: #{forward.1} parent=0 // pred_check
    _
  $region19: #{forward.1} parent=0 // pred_check_branch
    %22 = sbr.rel (0) target = $region21
  $region20: #{forward.1} parent=0 // pred_region
    _
  $region21: #{forward.1} parent=0 // pred_fallthru
    _
  // Predicated region
  $region22: #{forward.1} parent=0 // pred_check
    _
  $region23: #{forward.1} parent=0 // pred_check_branch
    %24 = sbr.rel (0) target = $region25
  $region24: #{forward.1} parent=0 // pred_region
    _
  $region25: #{forward.1} parent=0 // pred_fallthru
    _
  // Predicated region
  $region26: #{forward.1} parent=0 // pred_check
    _
  $region27: #{forward.1} parent=0 // pred_check_branch
    %26 = sbr.rel (0) target = $region29
  $region28: #{forward.1} parent=0 // pred_region
    _
  $region29: #{forward.1} parent=0 // pred_fallthru
    _
  // Predicated region
  $region30: #{forward.1} parent=0 // pred_check
    _
  $region31: #{forward.1} parent=0 // pred_check_branch
    %28 = sbr.rel (0) target = $region33
  $region32: #{forward.1} parent=0 // pred_region
    _
  $region33: #{forward.1} parent=0 // pred_fallthru
    _
  %v30 = vld [vmem:[%s3] sm:$0xff]
  %v31 = vld [vmem:[%s3 + $0x8] sm:$0xff]
  %v32 = vld [vmem:[%s3 + $0x10] sm:$0xff]
  %v33 = vld [vmem:[%s3 + $0x18] sm:$0xff]
  %v34 = vld [vmem:[%s4] sm:$0xf]
  %v35 = vld [vmem:[%s4 + $0x4] sm:$0xf]
  %v36 = vld [vmem:[%s4 + $0x8] sm:$0xf]
  %v37 = vld [vmem:[%s4 + $0xc] sm:$0xf]
  %v38 = vld [vmem:[%s5] sm:$0x1]
  %v39 = vld [vmem:[%s0] sm:$0xff]
  %v40 = vpack.c.bf16 %v39, %v39
  %v41 = vld [vmem:[%s1] sm:$0xff]
  %v42 = vld [vmem:[%s1 + $0x8] sm:$0xff]
  %v43 = vld [vmem:[%s1 + $0x10] sm:$0xff]
  %v44 = vld [vmem:[%s1 + $0x18] sm:$0xff]
  %v45 = vld [vmem:[%s1 + $0x20] sm:$0xff]
  %v46 = vld [vmem:[%s1 + $0x28] sm:$0xff]
  %v47 = vld [vmem:[%s1 + $0x30] sm:$0xff]
  %v48 = vld [vmem:[%s1 + $0x38] sm:$0xff]
  %v49 = vld [vmem:[%s1 + $0x40] sm:$0xff]
  %v50 = vld [vmem:[%s1 + $0x48] sm:$0xff]
  %v51 = vld [vmem:[%s1 + $0x50] sm:$0xff]
  %v52 = vld [vmem:[%s1 + $0x58] sm:$0xff]
  %v53 = vld [vmem:[%s1 + $0x60] sm:$0xff]
  %v54 = vld [vmem:[%s1 + $0x68] sm:$0xff]
  %v55 = vld [vmem:[%s1 + $0x70] sm:$0xff]
  %v56 = vld [vmem:[%s1 + $0x78] sm:$0xff]
  %v57 = vld [vmem:[%s1 + $0x80] sm:$0xff]
  %v58 = vld [vmem:[%s1 + $0x88] sm:$0xff]
  %v59 = vld [vmem:[%s1 + $0x90] sm:$0xff]
  %v60 = vld [vmem:[%s1 + $0x98] sm:$0xff]
  %v61 = vld [vmem:[%s1 + $0xa0] sm:$0xff]
  %v62 = vld [vmem:[%s1 + $0xa8] sm:$0xff]
  %v63 = vld [vmem:[%s1 + $0xb0] sm:$0xff]
  %v64 = vld [vmem:[%s1 + $0xb8] sm:$0xff]
  %v65 = vld [vmem:[%s1 + $0xc0] sm:$0xff]
  %v66 = vld [vmem:[%s1 + $0xc8] sm:$0xff]
  %v67 = vld [vmem:[%s1 + $0xd0] sm:$0xff]
  %v68 = vld [vmem:[%s1 + $0xd8] sm:$0xff]
  %v69 = vld [vmem:[%s1 + $0xe0] sm:$0xff]
  %v70 = vld [vmem:[%s1 + $0xe8] sm:$0xff]
  %v71 = vld [vmem:[%s1 + $0xf0] sm:$0xff]
  %v72 = vld [vmem:[%s1 + $0xf8] sm:$0xff]
  %v73 = vld [vmem:[%s1 + $0x100] sm:$0xff]
  %v74 = vld [vmem:[%s1 + $0x108] sm:$0xff]
  %v75 = vld [vmem:[%s1 + $0x110] sm:$0xff]
  %v76 = vld [vmem:[%s1 + $0x118] sm:$0xff]
  %v77 = vld [vmem:[%s1 + $0x120] sm:$0xff]
  %v78 = vld [vmem:[%s1 + $0x128] sm:$0xff]
  %v79 = vld [vmem:[%s1 + $0x130] sm:$0xff]
  %v80 = vld [vmem:[%s1 + $0x138] sm:$0xff]
  %v81 = vld [vmem:[%s1 + $0x140] sm:$0xff]
  %v82 = vld [vmem:[%s1 + $0x148] sm:$0xff]
  %v83 = vld [vmem:[%s1 + $0x150] sm:$0xff]
  %v84 = vld [vmem:[%s1 + $0x158] sm:$0xff]
  %v85 = vld [vmem:[%s1 + $0x160] sm:$0xff]
  %v86 = vld [vmem:[%s1 + $0x168] sm:$0xff]
  %v87 = vld [vmem:[%s1 + $0x170] sm:$0xff]
  %v88 = vld [vmem:[%s1 + $0x178] sm:$0xff]
  %v89 = vld [vmem:[%s1 + $0x180] sm:$0xff]
  %v90 = vld [vmem:[%s1 + $0x188] sm:$0xff]
  %v91 = vld [vmem:[%s1 + $0x190] sm:$0xff]
  %v92 = vld [vmem:[%s1 + $0x198] sm:$0xff]
  %v93 = vld [vmem:[%s1 + $0x1a0] sm:$0xff]
  %v94 = vld [vmem:[%s1 + $0x1a8] sm:$0xff]
  %v95 = vld [vmem:[%s1 + $0x1b0] sm:$0xff]
  %v96 = vld [vmem:[%s1 + $0x1b8] sm:$0xff]
  %v97 = vld [vmem:[%s1 + $0x1c0] sm:$0xff]
  %v98 = vld [vmem:[%s1 + $0x1c8] sm:$0xff]
  %v99 = vld [vmem:[%s1 + $0x1d0] sm:$0xff]
  %v100 = vld [vmem:[%s1 + $0x1d8] sm:$0xff]
  %v101 = vld [vmem:[%s1 + $0x1e0] sm:$0xff]
  %v102 = vld [vmem:[%s1 + $0x1e8] sm:$0xff]
  %v103 = vld [vmem:[%s1 + $0x1f0] sm:$0xff]
  %v104 = vld [vmem:[%s1 + $0x1f8] sm:$0xff]
  %v105 = vld [vmem:[%s2] sm:$0xff]
  %v107 = vlaneseq
  %v108 = vshrl.u32 %v107, 7
  %v109 = vsub.s32 0, %v108
  %v110 = vrot.slane %v105, %v109
  %v111 = vlaneseq
  %v112 = vshrl.u32 %v111, 7
  %v113 = vsub.s32 1, %v112
  %v114 = vrot.slane %v105, %v113
  %v115 = vlaneseq
  %v116 = vshrl.u32 %v115, 7
  %v117 = vsub.s32 2, %v116
  %v118 = vrot.slane %v105, %v117
  %v119 = vlaneseq
  %v120 = vshrl.u32 %v119, 7
  %v121 = vsub.s32 3, %v120
  %v122 = vrot.slane %v105, %v121
  %v123 = vlaneseq
  %v124 = vshrl.u32 %v123, 7
  %v125 = vsub.s32 4, %v124
  %v126 = vrot.slane %v105, %v125
  %v127 = vlaneseq
  %v128 = vshrl.u32 %v127, 7
  %v129 = vsub.s32 5, %v128
  %v130 = vrot.slane %v105, %v129
  %v131 = vlaneseq
  %v132 = vshrl.u32 %v131, 7
  %v133 = vsub.s32 6, %v132
  %v134 = vrot.slane %v105, %v133
  %v135 = vlaneseq
  %v136 = vshrl.u32 %v135, 7
  %v137 = vsub.s32 7, %v136
  %v138 = vrot.slane %v105, %v137
  %v211 = vunpack.c.l.b16 %v41
  %v212 = vunpack.c.h.b16 %v41
  %v213 = vunpack.c.l.b16 %v42
  %v214 = vunpack.c.h.b16 %v42
  %v215 = vunpack.c.l.b16 %v43
  %v216 = vunpack.c.h.b16 %v43
  %v217 = vunpack.c.l.b16 %v44
  %v218 = vunpack.c.h.b16 %v44
  %v219 = vunpack.c.l.b16 %v45
  %v220 = vunpack.c.h.b16 %v45
  %v221 = vunpack.c.l.b16 %v46
  %v222 = vunpack.c.h.b16 %v46
  %v223 = vunpack.c.l.b16 %v47
  %v224 = vunpack.c.h.b16 %v47
  %v225 = vunpack.c.l.b16 %v48
  %v226 = vunpack.c.h.b16 %v48
  %v227 = vunpack.c.l.b16 %v49
  %v228 = vunpack.c.h.b16 %v49
  %v229 = vunpack.c.l.b16 %v50
  %v230 = vunpack.c.h.b16 %v50
  %v231 = vunpack.c.l.b16 %v51
  %v232 = vunpack.c.h.b16 %v51
  %v233 = vunpack.c.l.b16 %v52
  %v234 = vunpack.c.h.b16 %v52
  %v235 = vunpack.c.l.b16 %v53
  %v236 = vunpack.c.h.b16 %v53
  %v237 = vunpack.c.l.b16 %v54
  %v238 = vunpack.c.h.b16 %v54
  %v239 = vunpack.c.l.b16 %v55
  %v240 = vunpack.c.h.b16 %v55
  %v241 = vunpack.c.l.b16 %v56
  %v242 = vunpack.c.h.b16 %v56
  %v243 = vunpack.c.l.b16 %v57
  %v244 = vunpack.c.h.b16 %v57
  %v245 = vunpack.c.l.b16 %v58
  %v246 = vunpack.c.h.b16 %v58
  %v247 = vunpack.c.l.b16 %v59
  %v248 = vunpack.c.h.b16 %v59
  %v249 = vunpack.c.l.b16 %v60
  %v250 = vunpack.c.h.b16 %v60
  %v251 = vunpack.c.l.b16 %v61
  %v252 = vunpack.c.h.b16 %v61
  %v253 = vunpack.c.l.b16 %v62
  %v254 = vunpack.c.h.b16 %v62
  %v255 = vunpack.c.l.b16 %v63
  %v256 = vunpack.c.h.b16 %v63
  %v257 = vunpack.c.l.b16 %v64
  %v258 = vunpack.c.h.b16 %v64
  %v259 = vunpack.c.l.b16 %v65
  %v260 = vunpack.c.h.b16 %v65
  %v261 = vunpack.c.l.b16 %v66
  %v262 = vunpack.c.h.b16 %v66
  %v263 = vunpack.c.l.b16 %v67
  %v264 = vunpack.c.h.b16 %v67
  %v265 = vunpack.c.l.b16 %v68
  %v266 = vunpack.c.h.b16 %v68
  %v267 = vunpack.c.l.b16 %v69
  %v268 = vunpack.c.h.b16 %v69
  %v269 = vunpack.c.l.b16 %v70
  %v270 = vunpack.c.h.b16 %v70
  %v271 = vunpack.c.l.b16 %v71
  %v272 = vunpack.c.h.b16 %v71
  %v273 = vunpack.c.l.b16 %v72
  %v274 = vunpack.c.h.b16 %v72
  %v275 = vunpack.c.l.b16 %v73
  %v276 = vunpack.c.h.b16 %v73
  %v277 = vunpack.c.l.b16 %v74
  %v278 = vunpack.c.h.b16 %v74
  %v279 = vunpack.c.l.b16 %v75
  %v280 = vunpack.c.h.b16 %v75
  %v281 = vunpack.c.l.b16 %v76
  %v282 = vunpack.c.h.b16 %v76
  %v283 = vunpack.c.l.b16 %v77
  %v284 = vunpack.c.h.b16 %v77
  %v285 = vunpack.c.l.b16 %v78
  %v286 = vunpack.c.h.b16 %v78
  %v287 = vunpack.c.l.b16 %v79
  %v288 = vunpack.c.h.b16 %v79
  %v289 = vunpack.c.l.b16 %v80
  %v290 = vunpack.c.h.b16 %v80
  %v291 = vunpack.c.l.b16 %v81
  %v292 = vunpack.c.h.b16 %v81
  %v293 = vunpack.c.l.b16 %v82
  %v294 = vunpack.c.h.b16 %v82
  %v295 = vunpack.c.l.b16 %v83
  %v296 = vunpack.c.h.b16 %v83
  %v297 = vunpack.c.l.b16 %v84
  %v298 = vunpack.c.h.b16 %v84
  %v299 = vunpack.c.l.b16 %v85
  %v300 = vunpack.c.h.b16 %v85
  %v301 = vunpack.c.l.b16 %v86
  %v302 = vunpack.c.h.b16 %v86
  %v303 = vunpack.c.l.b16 %v87
  %v304 = vunpack.c.h.b16 %v87
  %v305 = vunpack.c.l.b16 %v88
  %v306 = vunpack.c.h.b16 %v88
  %v307 = vunpack.c.l.b16 %v89
  %v308 = vunpack.c.h.b16 %v89
  %v309 = vunpack.c.l.b16 %v90
  %v310 = vunpack.c.h.b16 %v90
  %v311 = vunpack.c.l.b16 %v91
  %v312 = vunpack.c.h.b16 %v91
  %v313 = vunpack.c.l.b16 %v92
  %v314 = vunpack.c.h.b16 %v92
  %v315 = vunpack.c.l.b16 %v93
  %v316 = vunpack.c.h.b16 %v93
  %v317 = vunpack.c.l.b16 %v94
  %v318 = vunpack.c.h.b16 %v94
  %v319 = vunpack.c.l.b16 %v95
  %v320 = vunpack.c.h.b16 %v95
  %v321 = vunpack.c.l.b16 %v96
  %v322 = vunpack.c.h.b16 %v96
  %v323 = vunpack.c.l.b16 %v97
  %v324 = vunpack.c.h.b16 %v97
  %v325 = vunpack.c.l.b16 %v98
  %v326 = vunpack.c.h.b16 %v98
  %v327 = vunpack.c.l.b16 %v99
  %v328 = vunpack.c.h.b16 %v99
  %v329 = vunpack.c.l.b16 %v100
  %v330 = vunpack.c.h.b16 %v100
  %v331 = vunpack.c.l.b16 %v101
  %v332 = vunpack.c.h.b16 %v101
  %v333 = vunpack.c.l.b16 %v102
  %v334 = vunpack.c.h.b16 %v102
  %v335 = vunpack.c.l.b16 %v103
  %v336 = vunpack.c.h.b16 %v103
  %v337 = vunpack.c.l.b16 %v104
  %v338 = vunpack.c.h.b16 %v104
  %v339 = vpack.c.b16 %v219, %v211
  %v340 = vpack.c.b16 %v220, %v212
  %v341 = vpack.c.b16 %v221, %v213
  %v342 = vpack.c.b16 %v222, %v214
  %v343 = vpack.c.b16 %v223, %v215
  %v344 = vpack.c.b16 %v224, %v216
  %v345 = vpack.c.b16 %v225, %v217
  %v346 = vpack.c.b16 %v226, %v218
  %v347 = vpack.c.b16 %v235, %v227
  %v348 = vpack.c.b16 %v236, %v228
  %v349 = vpack.c.b16 %v237, %v229
  %v350 = vpack.c.b16 %v238, %v230
  %v351 = vpack.c.b16 %v239, %v231
  %v352 = vpack.c.b16 %v240, %v232
  %v353 = vpack.c.b16 %v241, %v233
  %v354 = vpack.c.b16 %v242, %v234
  %v355 = vpack.c.b16 %v251, %v243
  %v356 = vpack.c.b16 %v252, %v244
  %v357 = vpack.c.b16 %v253, %v245
  %v358 = vpack.c.b16 %v254, %v246
  %v359 = vpack.c.b16 %v255, %v247
  %v360 = vpack.c.b16 %v256, %v248
  %v361 = vpack.c.b16 %v257, %v249
  %v362 = vpack.c.b16 %v258, %v250
  %v363 = vpack.c.b16 %v267, %v259
  %v364 = vpack.c.b16 %v268, %v260
  %v365 = vpack.c.b16 %v269, %v261
  %v366 = vpack.c.b16 %v270, %v262
  %v367 = vpack.c.b16 %v271, %v263
  %v368 = vpack.c.b16 %v272, %v264
  %v369 = vpack.c.b16 %v273, %v265
  %v370 = vpack.c.b16 %v274, %v266
  %v371 = vpack.c.b16 %v283, %v275
  %v372 = vpack.c.b16 %v284, %v276
  %v373 = vpack.c.b16 %v285, %v277
  %v374 = vpack.c.b16 %v286, %v278
  %v375 = vpack.c.b16 %v287, %v279
  %v376 = vpack.c.b16 %v288, %v280
  %v377 = vpack.c.b16 %v289, %v281
  %v378 = vpack.c.b16 %v290, %v282
  %v379 = vpack.c.b16 %v299, %v291
  %v380 = vpack.c.b16 %v300, %v292
  %v381 = vpack.c.b16 %v301, %v293
  %v382 = vpack.c.b16 %v302, %v294
  %v383 = vpack.c.b16 %v303, %v295
  %v384 = vpack.c.b16 %v304, %v296
  %v385 = vpack.c.b16 %v305, %v297
  %v386 = vpack.c.b16 %v306, %v298
  %v387 = vpack.c.b16 %v315, %v307
  %v388 = vpack.c.b16 %v316, %v308
  %v389 = vpack.c.b16 %v317, %v309
  %v390 = vpack.c.b16 %v318, %v310
  %v391 = vpack.c.b16 %v319, %v311
  %v392 = vpack.c.b16 %v320, %v312
  %v393 = vpack.c.b16 %v321, %v313
  %v394 = vpack.c.b16 %v322, %v314
  %v395 = vpack.c.b16 %v331, %v323
  %v396 = vpack.c.b16 %v332, %v324
  %v397 = vpack.c.b16 %v333, %v325
  %v398 = vpack.c.b16 %v334, %v326
  %v399 = vpack.c.b16 %v335, %v327
  %v400 = vpack.c.b16 %v336, %v328
  %v401 = vpack.c.b16 %v337, %v329
  %v402 = vpack.c.b16 %v338, %v330
  %467 = vmatprep.subr.bf16.mxu0 %v340
  %468 = vmatpush1.bf16.msra.mxu0 %v339
  %469 = vmatprep.subr.bf16.mxu0 %v348
  %470 = vmatpush1.bf16.msra.mxu0 %v347
  %471 = vmatprep.subr.bf16.mxu0 %v356
  %472 = vmatpush1.bf16.msra.mxu0 %v355
  %473 = vmatprep.subr.bf16.mxu0 %v364
  %474 = vmatpush1.bf16.msra.mxu0 %v363
  %475 = vmatprep.subr.bf16.mxu0 %v372
  %476 = vmatpush1.bf16.msra.mxu0 %v371
  %477 = vmatprep.subr.bf16.mxu0 %v380
  %478 = vmatpush1.bf16.msra.mxu0 %v379
  %479 = vmatprep.subr.bf16.mxu0 %v388
  %480 = vmatpush1.bf16.msra.mxu0 %v387
  %481 = vmatprep.subr.bf16.mxu0 %v396
  %482 = vmatpush1.bf16.msra.mxu0 %v395
  %483 = vmatprep.subr.bf16.mxu0 0
  %484 = vmatpush1.bf16.msra.mxu0 0
  %485 = vmatprep.subr.bf16.mxu0 0
  %486 = vmatpush1.bf16.msra.mxu0 0
  %487 = vmatprep.subr.bf16.mxu0 0
  %488 = vmatpush1.bf16.msra.mxu0 0
  %489 = vmatprep.subr.bf16.mxu0 0
  %490 = vmatpush1.bf16.msra.mxu0 0
  %491 = vmatprep.subr.bf16.mxu0 0
  %492 = vmatpush1.bf16.msra.mxu0 0
  %493 = vmatprep.subr.bf16.mxu0 0
  %494 = vmatpush1.bf16.msra.mxu0 0
  %495 = vmatprep.subr.bf16.mxu0 0
  %496 = vmatpush1.bf16.msra.mxu0 0
  %497 = vmatprep.subr.bf16.mxu0 0
  %498 = vmatpush1.bf16.msra.mxu0 0
  %499 = vmatprep.mubr.bf16.mxu0 0
  %500 = vmatmul.mubr.bf16.gmra.mrb[0].mxu0 %v40
  %v501 = vpop.f32.mrb[0].mxu0
  %v502 = vadd.f32 %v110, %v501
  %v503 = vpop.f32.mrb[0].mxu0
  %v504 = vadd.f32 %v114, %v503
  %v505 = vpop.f32.mrb[0].mxu0
  %v506 = vpop.f32.mrb[0].mxu0
  %507 = vdwg.mxu0
  %508 = vmatprep.subr.bf16.mxu0 %v342
  %509 = vmatpush1.bf16.msra.mxu0 %v341
  %510 = vmatprep.subr.bf16.mxu0 %v350
  %511 = vmatpush1.bf16.msra.mxu0 %v349
  %512 = vmatprep.subr.bf16.mxu0 %v358
  %513 = vmatpush1.bf16.msra.mxu0 %v357
  %514 = vmatprep.subr.bf16.mxu0 %v366
  %515 = vmatpush1.bf16.msra.mxu0 %v365
  %516 = vmatprep.subr.bf16.mxu0 %v374
  %517 = vmatpush1.bf16.msra.mxu0 %v373
  %518 = vmatprep.subr.bf16.mxu0 %v382
  %519 = vmatpush1.bf16.msra.mxu0 %v381
  %520 = vmatprep.subr.bf16.mxu0 %v390
  %521 = vmatpush1.bf16.msra.mxu0 %v389
  %522 = vmatprep.subr.bf16.mxu0 %v398
  %523 = vmatpush1.bf16.msra.mxu0 %v397
  %524 = vmatprep.subr.bf16.mxu0 0
  %525 = vmatpush1.bf16.msra.mxu0 0
  %526 = vmatprep.subr.bf16.mxu0 0
  %527 = vmatpush1.bf16.msra.mxu0 0
  %528 = vmatprep.subr.bf16.mxu0 0
  %529 = vmatpush1.bf16.msra.mxu0 0
  %530 = vmatprep.subr.bf16.mxu0 0
  %531 = vmatpush1.bf16.msra.mxu0 0
  %532 = vmatprep.subr.bf16.mxu0 0
  %533 = vmatpush1.bf16.msra.mxu0 0
  %534 = vmatprep.subr.bf16.mxu0 0
  %535 = vmatpush1.bf16.msra.mxu0 0
  %536 = vmatprep.subr.bf16.mxu0 0
  %537 = vmatpush1.bf16.msra.mxu0 0
  %538 = vmatprep.subr.bf16.mxu0 0
  %539 = vmatpush1.bf16.msra.mxu0 0
  %540 = vmatprep.mubr.bf16.mxu0 0
  %541 = vmatmul.mubr.bf16.gmra.mrb[0].mxu0 %v40
  %v542 = vpop.f32.mrb[0].mxu0
  %v543 = vadd.f32 %v118, %v542
  %v544 = vpop.f32.mrb[0].mxu0
  %v545 = vadd.f32 %v122, %v544
  %v546 = vpop.f32.mrb[0].mxu0
  %v547 = vpop.f32.mrb[0].mxu0
  %548 = vdwg.mxu0
  %549 = vmatprep.subr.bf16.mxu0 %v344
  %550 = vmatpush1.bf16.msra.mxu0 %v343
  %551 = vmatprep.subr.bf16.mxu0 %v352
  %552 = vmatpush1.bf16.msra.mxu0 %v351
  %553 = vmatprep.subr.bf16.mxu0 %v360
  %554 = vmatpush1.bf16.msra.mxu0 %v359
  %555 = vmatprep.subr.bf16.mxu0 %v368
  %556 = vmatpush1.bf16.msra.mxu0 %v367
  %557 = vmatprep.subr.bf16.mxu0 %v376
  %558 = vmatpush1.bf16.msra.mxu0 %v375
  %559 = vmatprep.subr.bf16.mxu0 %v384
  %560 = vmatpush1.bf16.msra.mxu0 %v383
  %561 = vmatprep.subr.bf16.mxu0 %v392
  %562 = vmatpush1.bf16.msra.mxu0 %v391
  %563 = vmatprep.subr.bf16.mxu0 %v400
  %564 = vmatpush1.bf16.msra.mxu0 %v399
  %565 = vmatprep.subr.bf16.mxu0 0
  %566 = vmatpush1.bf16.msra.mxu0 0
  %567 = vmatprep.subr.bf16.mxu0 0
  %568 = vmatpush1.bf16.msra.mxu0 0
  %569 = vmatprep.subr.bf16.mxu0 0
  %570 = vmatpush1.bf16.msra.mxu0 0
  %571 = vmatprep.subr.bf16.mxu0 0
  %572 = vmatpush1.bf16.msra.mxu0 0
  %573 = vmatprep.subr.bf16.mxu0 0
  %574 = vmatpush1.bf16.msra.mxu0 0
  %575 = vmatprep.subr.bf16.mxu0 0
  %576 = vmatpush1.bf16.msra.mxu0 0
  %577 = vmatprep.subr.bf16.mxu0 0
  %578 = vmatpush1.bf16.msra.mxu0 0
  %579 = vmatprep.subr.bf16.mxu0 0
  %580 = vmatpush1.bf16.msra.mxu0 0
  %581 = vmatprep.mubr.bf16.mxu0 0
  %582 = vmatmul.mubr.bf16.gmra.mrb[0].mxu0 %v40
  %v583 = vpop.f32.mrb[0].mxu0
  %v584 = vadd.f32 %v126, %v583
  %v585 = vpop.f32.mrb[0].mxu0
  %v586 = vadd.f32 %v130, %v585
  %v587 = vpop.f32.mrb[0].mxu0
  %v588 = vpop.f32.mrb[0].mxu0
  %589 = vdwg.mxu0
  %590 = vmatprep.subr.bf16.mxu0 %v346
  %591 = vmatpush1.bf16.msra.mxu0 %v345
  %592 = vmatprep.subr.bf16.mxu0 %v354
  %593 = vmatpush1.bf16.msra.mxu0 %v353
  %594 = vmatprep.subr.bf16.mxu0 %v362
  %595 = vmatpush1.bf16.msra.mxu0 %v361
  %596 = vmatprep.subr.bf16.mxu0 %v370
  %597 = vmatpush1.bf16.msra.mxu0 %v369
  %598 = vmatprep.subr.bf16.mxu0 %v378
  %599 = vmatpush1.bf16.msra.mxu0 %v377
  %600 = vmatprep.subr.bf16.mxu0 %v386
  %601 = vmatpush1.bf16.msra.mxu0 %v385
  %602 = vmatprep.subr.bf16.mxu0 %v394
  %603 = vmatpush1.bf16.msra.mxu0 %v393
  %604 = vmatprep.subr.bf16.mxu0 %v402
  %605 = vmatpush1.bf16.msra.mxu0 %v401
  %606 = vmatprep.subr.bf16.mxu0 0
  %607 = vmatpush1.bf16.msra.mxu0 0
  %608 = vmatprep.subr.bf16.mxu0 0
  %609 = vmatpush1.bf16.msra.mxu0 0
  %610 = vmatprep.subr.bf16.mxu0 0
  %611 = vmatpush1.bf16.msra.mxu0 0
  %612 = vmatprep.subr.bf16.mxu0 0
  %613 = vmatpush1.bf16.msra.mxu0 0
  %614 = vmatprep.subr.bf16.mxu0 0
  %615 = vmatpush1.bf16.msra.mxu0 0
  %616 = vmatprep.subr.bf16.mxu0 0
  %617 = vmatpush1.bf16.msra.mxu0 0
  %618 = vmatprep.subr.bf16.mxu0 0
  %619 = vmatpush1.bf16.msra.mxu0 0
  %620 = vmatprep.subr.bf16.mxu0 0
  %621 = vmatpush1.bf16.msra.mxu0 0
  %622 = vmatprep.mubr.bf16.mxu0 0
  %623 = vmatmul.mubr.bf16.gmra.mrb[0].mxu0 %v40
  %v624 = vpop.f32.mrb[0].mxu0
  %v625 = vadd.f32 %v134, %v624
  %v626 = vpop.f32.mrb[0].mxu0
  %v627 = vadd.f32 %v138, %v626
  %v628 = vpop.f32.mrb[0].mxu0
  %v629 = vpop.f32.mrb[0].mxu0
  %630 = vdwg.mxu0
  %v631 = vxor.u32 %v502, 2147483648
  %v632 = vmul.f32 %v631, 1.442695
  %v633 = vpow.pop %v632
  %v634 = vadd.f32 %v633, 1.0
  %v635 = vrcp.pop %v634
  %v636 = vmul.f32 1.0, %v635
  %v637 = vtanh.pop %v502
  %639 = vrot.lane.b32.xlu0 %v637, 32
  %v640 = vpop.permute.xlu0 %639
  %v642 = vmul.f32 %v636, %v640
  %v643 = vtanh.pop %v642
  %645 = vrot.lane.b32.xlu0 %v643, 64
  %v646 = vpop.permute.xlu0 %645
  %v648 = vmul.f32 %v636, %v646
  %v649 = vpack.c.bf16 %v648, %v648
  %651 = vrot.lane.b32.xlu0 %v649, 64
  %v652 = vpop.permute.xlu0 %651
  %v657 = vunpack.c.l.b16 %v30
  %v658 = vunpack.c.h.b16 %v30
  %v659 = vunpack.c.l.b16 %v31
  %v660 = vunpack.c.h.b16 %v31
  %v661 = vunpack.c.l.b16 %v32
  %v662 = vunpack.c.h.b16 %v32
  %v663 = vunpack.c.l.b16 %v33
  %v664 = vunpack.c.h.b16 %v33
  %v665 = vpack.c.b16 %v659, %v657
  %v666 = vpack.c.b16 %v660, %v658
  %v667 = vpack.c.b16 %v663, %v661
  %v668 = vpack.c.b16 %v664, %v662
  %vm673 = vcmask 261120
  %v675 = vsel %vm673, %v652, 0
  %677 = vmatprep.subr.bf16.mxu0 %v666
  %678 = vmatpush1.bf16.msra.mxu0 %v665
  %679 = vmatprep.subr.bf16.mxu0 %v668
  %680 = vmatpush1.bf16.msra.mxu0 %v667
  %681 = vmatprep.subr.bf16.mxu0 0
  %682 = vmatpush1.bf16.msra.mxu0 0
  %683 = vmatprep.subr.bf16.mxu0 0
  %684 = vmatpush1.bf16.msra.mxu0 0
  %685 = vmatprep.subr.bf16.mxu0 0
  %686 = vmatpush1.bf16.msra.mxu0 0
  %687 = vmatprep.subr.bf16.mxu0 0
  %688 = vmatpush1.bf16.msra.mxu0 0
  %689 = vmatprep.subr.bf16.mxu0 0
  %690 = vmatpush1.bf16.msra.mxu0 0
  %691 = vmatprep.subr.bf16.mxu0 0
  %692 = vmatpush1.bf16.msra.mxu0 0
  %693 = vmatprep.subr.bf16.mxu0 0
  %694 = vmatpush1.bf16.msra.mxu0 0
  %695 = vmatprep.subr.bf16.mxu0 0
  %696 = vmatpush1.bf16.msra.mxu0 0
  %697 = vmatprep.subr.bf16.mxu0 0
  %698 = vmatpush1.bf16.msra.mxu0 0
  %699 = vmatprep.subr.bf16.mxu0 0
  %700 = vmatpush1.bf16.msra.mxu0 0
  %701 = vmatprep.subr.bf16.mxu0 0
  %702 = vmatpush1.bf16.msra.mxu0 0
  %703 = vmatprep.subr.bf16.mxu0 0
  %704 = vmatpush1.bf16.msra.mxu0 0
  %705 = vmatprep.subr.bf16.mxu0 0
  %706 = vmatpush1.bf16.msra.mxu0 0
  %707 = vmatprep.subr.bf16.mxu0 0
  %708 = vmatpush1.bf16.msra.mxu0 0
  %709 = vmatprep.mubr.bf16.mxu0 0
  %710 = vmatmul.mubr.bf16.gmra.mrb[0].mxu0 %v675
  %v711 = vpop.f32.mrb[0].mxu0
  %v712 = vadd.f32 0.0, %v711
  %v713 = vpop.f32.mrb[0].mxu0
  %v714 = vadd.f32 0.0, %v713
  %v715 = vpop.f32.mrb[0].mxu0
  %v716 = vpop.f32.mrb[0].mxu0
  %717 = vdwg.mxu0
  %v719 = vlaneseq
  %v720 = vshrl.u32 %v719, 7
  %v721 = vsub.s32 0, %v720
  %v722 = vrot.slane %v38, %v721
  %v724 = vadd.f32 %v714, %v722
  %v729 = vunpack.c.l.b16 %v34
  %v730 = vunpack.c.l.b16 %v35
  %v731 = vunpack.c.l.b16 %v36
  %v732 = vunpack.c.l.b16 %v37
  %v733 = vpack.c.b16 %v730, %v729
  %v734 = vpack.c.b16 %v732, %v731
  %v738 = vsel %vm673, 0, 0
  %740 = vmatprep.subr.bf16.mxu0 0
  %741 = vmatpush1.bf16.msra.mxu0 %v733
  %742 = vmatprep.subr.bf16.mxu0 0
  %743 = vmatpush1.bf16.msra.mxu0 %v734
  %744 = vmatprep.subr.bf16.mxu0 0
  %745 = vmatpush1.bf16.msra.mxu0 0
  %746 = vmatprep.subr.bf16.mxu0 0
  %747 = vmatpush1.bf16.msra.mxu0 0
  %748 = vmatprep.subr.bf16.mxu0 0
  %749 = vmatpush1.bf16.msra.mxu0 0
  %750 = vmatprep.subr.bf16.mxu0 0
  %751 = vmatpush1.bf16.msra.mxu0 0
  %752 = vmatprep.subr.bf16.mxu0 0
  %753 = vmatpush1.bf16.msra.mxu0 0
  %754 = vmatprep.subr.bf16.mxu0 0
  %755 = vmatpush1.bf16.msra.mxu0 0
  %756 = vmatprep.subr.bf16.mxu0 0
  %757 = vmatpush1.bf16.msra.mxu0 0
  %758 = vmatprep.subr.bf16.mxu0 0
  %759 = vmatpush1.bf16.msra.mxu0 0
  %760 = vmatprep.subr.bf16.mxu0 0
  %761 = vmatpush1.bf16.msra.mxu0 0
  %762 = vmatprep.subr.bf16.mxu0 0
  %763 = vmatpush1.bf16.msra.mxu0 0
  %764 = vmatprep.subr.bf16.mxu0 0
  %765 = vmatpush1.bf16.msra.mxu0 0
  %766 = vmatprep.subr.bf16.mxu0 0
  %767 = vmatpush1.bf16.msra.mxu0 0
  %768 = vmatprep.subr.bf16.mxu0 0
  %769 = vmatpush1.bf16.msra.mxu0 0
  %770 = vmatprep.subr.bf16.mxu0 0
  %771 = vmatpush1.bf16.msra.mxu0 0
  %772 = vmatprep.mubr.bf16.mxu0 0
  %773 = vmatmul.mubr.bf16.gmra.mrb[0].mxu0 %v738
  %v774 = vpop.f32.mrb[0].mxu0
  %v775 = vadd.f32 0.0, %v774
  %v776 = vpop.f32.mrb[0].mxu0
  %v777 = vpop.f32.mrb[0].mxu0
  %v778 = vpop.f32.mrb[0].mxu0
  %779 = vdwg.mxu0
  %v780 = vadd.f32 %v724, %v775
  %v781 = vxor.u32 %v780, 2147483648
  %v782 = vmul.f32 %v781, 1.442695
  %v783 = vpow.pop %v782
  %v784 = vadd.f32 %v783, 1.0
  %v785 = vrcp.pop %v784
  %v786 = vmul.f32 1.0, %v785
  %v787 = vtanh.pop %v780
  %v788 = vmul.f32 %v786, 0.0
  %790 = vrot.lane.b32.xlu0 %v787, 32
  %v791 = vpop.permute.xlu0 %790
  %v793 = vmul.f32 %v786, %v791
  %795 = vrot.lane.b32.xlu0 %v793, 32
  %v796 = vpop.permute.xlu0 %795
  %v798 = vadd.f32 %v788, %v796
  %v799 = vtanh.pop %v798
  %801 = vrot.lane.b32.xlu0 %v799, 32
  %v802 = vpop.permute.xlu0 %801
  %v804 = vmul.f32 %v786, %v802
  %v805 = vadd.f32 %v504, %v712
  %v806 = vxor.u32 %v805, 2147483648
  %v807 = vmul.f32 %v806, 1.442695
  %v808 = vpow.pop %v807
  %v809 = vadd.f32 %v808, 1.0
  %v810 = vrcp.pop %v809
  %v811 = vmul.f32 1.0, %v810
  %v812 = vtanh.pop %v805
  %814 = vrot.lane.b32.xlu0 %v642, 32
  %v815 = vpop.permute.xlu0 %814
  %v817 = vmul.f32 %v811, %v815
  %819 = vrot.lane.b32.xlu0 %v812, 32
  %v820 = vpop.permute.xlu0 %819
  %v822 = vmul.f32 %v811, %v820
  %824 = vrot.lane.b32.xlu0 %v822, 32
  %v825 = vpop.permute.xlu0 %824
  %v827 = vadd.f32 %v817, %v825
  %v828 = vtanh.pop %v827
  %830 = vrot.lane.b32.xlu0 %v828, 32
  %v831 = vpop.permute.xlu0 %830
  %v833 = vmul.f32 %v811, %v831
  %v834 = vpack.c.bf16 %v833, %v833
  %836 = vrot.lane.b32.xlu0 %v834, 64
  %v837 = vpop.permute.xlu0 %836
  %v839 = vsel %vm673, %v837, 0
  %841 = vmatprep.subr.bf16.mxu0 %v666
  %842 = vmatpush1.bf16.msra.mxu0 %v665
  %843 = vmatprep.subr.bf16.mxu0 %v668
  %844 = vmatpush1.bf16.msra.mxu0 %v667
  %845 = vmatprep.subr.bf16.mxu0 0
  %846 = vmatpush1.bf16.msra.mxu0 0
  %847 = vmatprep.subr.bf16.mxu0 0
  %848 = vmatpush1.bf16.msra.mxu0 0
  %849 = vmatprep.subr.bf16.mxu0 0
  %850 = vmatpush1.bf16.msra.mxu0 0
  %851 = vmatprep.subr.bf16.mxu0 0
  %852 = vmatpush1.bf16.msra.mxu0 0
  %853 = vmatprep.subr.bf16.mxu0 0
  %854 = vmatpush1.bf16.msra.mxu0 0
  %855 = vmatprep.subr.bf16.mxu0 0
  %856 = vmatpush1.bf16.msra.mxu0 0
  %857 = vmatprep.subr.bf16.mxu0 0
  %858 = vmatpush1.bf16.msra.mxu0 0
  %859 = vmatprep.subr.bf16.mxu0 0
  %860 = vmatpush1.bf16.msra.mxu0 0
  %861 = vmatprep.subr.bf16.mxu0 0
  %862 = vmatpush1.bf16.msra.mxu0 0
  %863 = vmatprep.subr.bf16.mxu0 0
  %864 = vmatpush1.bf16.msra.mxu0 0
  %865 = vmatprep.subr.bf16.mxu0 0
  %866 = vmatpush1.bf16.msra.mxu0 0
  %867 = vmatprep.subr.bf16.mxu0 0
  %868 = vmatpush1.bf16.msra.mxu0 0
  %869 = vmatprep.subr.bf16.mxu0 0
  %870 = vmatpush1.bf16.msra.mxu0 0
  %871 = vmatprep.subr.bf16.mxu0 0
  %872 = vmatpush1.bf16.msra.mxu0 0
  %873 = vmatprep.mubr.bf16.mxu0 0
  %874 = vmatmul.mubr.bf16.gmra.mrb[0].mxu0 %v839
  %v875 = vpop.f32.mrb[0].mxu0
  %v876 = vadd.f32 0.0, %v875
  %v877 = vpop.f32.mrb[0].mxu0
  %v878 = vadd.f32 0.0, %v877
  %v879 = vpop.f32.mrb[0].mxu0
  %v880 = vpop.f32.mrb[0].mxu0
  %881 = vdwg.mxu0
  %v882 = vadd.f32 %v878, %v722
  %v883 = vpack.c.bf16 %v804, %v804
  %885 = vrot.lane.b32.xlu0 %v883, 64
  %v886 = vpop.permute.xlu0 %885
  %v888 = vsel %vm673, %v886, 0
  %890 = vmatprep.subr.bf16.mxu0 0
  %891 = vmatpush1.bf16.msra.mxu0 %v733
  %892 = vmatprep.subr.bf16.mxu0 0
  %893 = vmatpush1.bf16.msra.mxu0 %v734
  %894 = vmatprep.subr.bf16.mxu0 0
  %895 = vmatpush1.bf16.msra.mxu0 0
  %896 = vmatprep.subr.bf16.mxu0 0
  %897 = vmatpush1.bf16.msra.mxu0 0
  %898 = vmatprep.subr.bf16.mxu0 0
  %899 = vmatpush1.bf16.msra.mxu0 0
  %900 = vmatprep.subr.bf16.mxu0 0
  %901 = vmatpush1.bf16.msra.mxu0 0
  %902 = vmatprep.subr.bf16.mxu0 0
  %903 = vmatpush1.bf16.msra.mxu0 0
  %904 = vmatprep.subr.bf16.mxu0 0
  %905 = vmatpush1.bf16.msra.mxu0 0
  %906 = vmatprep.subr.bf16.mxu0 0
  %907 = vmatpush1.bf16.msra.mxu0 0
  %908 = vmatprep.subr.bf16.mxu0 0
  %909 = vmatpush1.bf16.msra.mxu0 0
  %910 = vmatprep.subr.bf16.mxu0 0
  %911 = vmatpush1.bf16.msra.mxu0 0
  %912 = vmatprep.subr.bf16.mxu0 0
  %913 = vmatpush1.bf16.msra.mxu0 0
  %914 = vmatprep.subr.bf16.mxu0 0
  %915 = vmatpush1.bf16.msra.mxu0 0
  %916 = vmatprep.subr.bf16.mxu0 0
  %917 = vmatpush1.bf16.msra.mxu0 0
  %918 = vmatprep.subr.bf16.mxu0 0
  %919 = vmatpush1.bf16.msra.mxu0 0
  %920 = vmatprep.subr.bf16.mxu0 0
  %921 = vmatpush1.bf16.msra.mxu0 0
  %922 = vmatprep.mubr.bf16.mxu0 0
  %923 = vmatmul.mubr.bf16.gmra.mrb[0].mxu0 %v888
  %v924 = vpop.f32.mrb[0].mxu0
  %v925 = vadd.f32 0.0, %v924
  %v926 = vpop.f32.mrb[0].mxu0
  %v927 = vpop.f32.mrb[0].mxu0
  %v928 = vpop.f32.mrb[0].mxu0
  %929 = vdwg.mxu0
  %v930 = vadd.f32 %v882, %v925
  %v931 = vxor.u32 %v930, 2147483648
  %v932 = vmul.f32 %v931, 1.442695
  %v933 = vpow.pop %v932
  %v934 = vadd.f32 %v933, 1.0
  %v935 = vrcp.pop %v934
  %v936 = vmul.f32 1.0, %v935
  %v937 = vtanh.pop %v930
  %v938 = vmul.f32 %v936, %v798
  %940 = vrot.lane.b32.xlu0 %v937, 32
  %v941 = vpop.permute.xlu0 %940
  %v943 = vmul.f32 %v936, %v941
  %945 = vrot.lane.b32.xlu0 %v943, 32
  %v946 = vpop.permute.xlu0 %945
  %v948 = vadd.f32 %v938, %v946
  %v949 = vtanh.pop %v948
  %951 = vrot.lane.b32.xlu0 %v949, 32
  %v952 = vpop.permute.xlu0 %951
  %v954 = vmul.f32 %v936, %v952
  %v955 = vadd.f32 %v543, %v876
  %v956 = vxor.u32 %v955, 2147483648
  %v957 = vmul.f32 %v956, 1.442695
  %v958 = vpow.pop %v957
  %v959 = vadd.f32 %v958, 1.0
  %v960 = vrcp.pop %v959
  %v961 = vmul.f32 1.0, %v960
  %v962 = vtanh.pop %v955
  %v963 = vmul.f32 %v961, %v827
  %965 = vrot.lane.b32.xlu0 %v962, 32
  %v966 = vpop.permute.xlu0 %965
  %v968 = vmul.f32 %v961, %v966
  %970 = vrot.lane.b32.xlu0 %v968, 32
  %v971 = vpop.permute.xlu0 %970
  %v973 = vadd.f32 %v963, %v971
  %v974 = vtanh.pop %v973
  %976 = vrot.lane.b32.xlu0 %v974, 32
  %v977 = vpop.permute.xlu0 %976
  %v979 = vmul.f32 %v961, %v977
  %v980 = vpack.c.bf16 %v979, %v979
  %982 = vrot.lane.b32.xlu0 %v980, 64
  %v983 = vpop.permute.xlu0 %982
  %v985 = vsel %vm673, %v983, 0
  %987 = vmatprep.subr.bf16.mxu0 %v666
  %988 = vmatpush1.bf16.msra.mxu0 %v665
  %989 = vmatprep.subr.bf16.mxu0 %v668
  %990 = vmatpush1.bf16.msra.mxu0 %v667
  %991 = vmatprep.subr.bf16.mxu0 0
  %992 = vmatpush1.bf16.msra.mxu0 0
  %993 = vmatprep.subr.bf16.mxu0 0
  %994 = vmatpush1.bf16.msra.mxu0 0
  %995 = vmatprep.subr.bf16.mxu0 0
  %996 = vmatpush1.bf16.msra.mxu0 0
  %997 = vmatprep.subr.bf16.mxu0 0
  %998 = vmatpush1.bf16.msra.mxu0 0
  %999 = vmatprep.subr.bf16.mxu0 0
  %1000 = vmatpush1.bf16.msra.mxu0 0
  %1001 = vmatprep.subr.bf16.mxu0 0
  %1002 = vmatpush1.bf16.msra.mxu0 0
  %1003 = vmatprep.subr.bf16.mxu0 0
  %1004 = vmatpush1.bf16.msra.mxu0 0
  %1005 = vmatprep.subr.bf16.mxu0 0
  %1006 = vmatpush1.bf16.msra.mxu0 0
  %1007 = vmatprep.subr.bf16.mxu0 0
  %1008 = vmatpush1.bf16.msra.mxu0 0
  %1009 = vmatprep.subr.bf16.mxu0 0
  %1010 = vmatpush1.bf16.msra.mxu0 0
  %1011 = vmatprep.subr.bf16.mxu0 0
  %1012 = vmatpush1.bf16.msra.mxu0 0
  %1013 = vmatprep.subr.bf16.mxu0 0
  %1014 = vmatpush1.bf16.msra.mxu0 0
  %1015 = vmatprep.subr.bf16.mxu0 0
  %1016 = vmatpush1.bf16.msra.mxu0 0
  %1017 = vmatprep.subr.bf16.mxu0 0
  %1018 = vmatpush1.bf16.msra.mxu0 0
  %1019 = vmatprep.mubr.bf16.mxu0 0
  %1020 = vmatmul.mubr.bf16.gmra.mrb[0].mxu0 %v985
  %v1021 = vpop.f32.mrb[0].mxu0
  %v1022 = vadd.f32 0.0, %v1021
  %v1023 = vpop.f32.mrb[0].mxu0
  %v1024 = vadd.f32 0.0, %v1023
  %v1025 = vpop.f32.mrb[0].mxu0
  %v1026 = vpop.f32.mrb[0].mxu0
  %1027 = vdwg.mxu0
  %v1028 = vadd.f32 %v1024, %v722
  %v1029 = vpack.c.bf16 %v954, %v954
  %1031 = vrot.lane.b32.xlu0 %v1029, 64
  %v1032 = vpop.permute.xlu0 %1031
  %v1034 = vsel %vm673, %v1032, 0
  %1036 = vmatprep.subr.bf16.mxu0 0
  %1037 = vmatpush1.bf16.msra.mxu0 %v733
  %1038 = vmatprep.subr.bf16.mxu0 0
  %1039 = vmatpush1.bf16.msra.mxu0 %v734
  %1040 = vmatprep.subr.bf16.mxu0 0
  %1041 = vmatpush1.bf16.msra.mxu0 0
  %1042 = vmatprep.subr.bf16.mxu0 0
  %1043 = vmatpush1.bf16.msra.mxu0 0
  %1044 = vmatprep.subr.bf16.mxu0 0
  %1045 = vmatpush1.bf16.msra.mxu0 0
  %1046 = vmatprep.subr.bf16.mxu0 0
  %1047 = vmatpush1.bf16.msra.mxu0 0
  %1048 = vmatprep.subr.bf16.mxu0 0
  %1049 = vmatpush1.bf16.msra.mxu0 0
  %1050 = vmatprep.subr.bf16.mxu0 0
  %1051 = vmatpush1.bf16.msra.mxu0 0
  %1052 = vmatprep.subr.bf16.mxu0 0
  %1053 = vmatpush1.bf16.msra.mxu0 0
  %1054 = vmatprep.subr.bf16.mxu0 0
  %1055 = vmatpush1.bf16.msra.mxu0 0
  %1056 = vmatprep.subr.bf16.mxu0 0
  %1057 = vmatpush1.bf16.msra.mxu0 0
  %1058 = vmatprep.subr.bf16.mxu0 0
  %1059 = vmatpush1.bf16.msra.mxu0 0
  %1060 = vmatprep.subr.bf16.mxu0 0
  %1061 = vmatpush1.bf16.msra.mxu0 0
  %1062 = vmatprep.subr.bf16.mxu0 0
  %1063 = vmatpush1.bf16.msra.mxu0 0
  %1064 = vmatprep.subr.bf16.mxu0 0
  %1065 = vmatpush1.bf16.msra.mxu0 0
  %1066 = vmatprep.subr.bf16.mxu0 0
  %1067 = vmatpush1.bf16.msra.mxu0 0
  %1068 = vmatprep.mubr.bf16.mxu0 0
  %1069 = vmatmul.mubr.bf16.gmra.mrb[0].mxu0 %v1034
  %v1070 = vpop.f32.mrb[0].mxu0
  %v1071 = vadd.f32 0.0, %v1070
  %v1072 = vpop.f32.mrb[0].mxu0
  %v1073 = vpop.f32.mrb[0].mxu0
  %v1074 = vpop.f32.mrb[0].mxu0
  %1075 = vdwg.mxu0
  %v1076 = vadd.f32 %v1028, %v1071
  %v1077 = vxor.u32 %v1076, 2147483648
  %v1078 = vmul.f32 %v1077, 1.442695
  %v1079 = vpow.pop %v1078
  %v1080 = vadd.f32 %v1079, 1.0
  %v1081 = vrcp.pop %v1080
  %v1082 = vmul.f32 1.0, %v1081
  %v1083 = vtanh.pop %v1076
  %v1084 = vmul.f32 %v1082, %v948
  %1086 = vrot.lane.b32.xlu0 %v1083, 32
  %v1087 = vpop.permute.xlu0 %1086
  %v1089 = vmul.f32 %v1082, %v1087
  %1091 = vrot.lane.b32.xlu0 %v1089, 32
  %v1092 = vpop.permute.xlu0 %1091
  %v1094 = vadd.f32 %v1084, %v1092
  %v1095 = vtanh.pop %v1094
  %1097 = vrot.lane.b32.xlu0 %v1095, 32
  %v1098 = vpop.permute.xlu0 %1097
  %v1100 = vmul.f32 %v1082, %v1098
  %v1101 = vadd.f32 %v545, %v1022
  %v1102 = vxor.u32 %v1101, 2147483648
  %v1103 = vmul.f32 %v1102, 1.442695
  %v1104 = vpow.pop %v1103
  %v1105 = vadd.f32 %v1104, 1.0
  %v1106 = vrcp.pop %v1105
  %v1107 = vmul.f32 1.0, %v1106
  %v1108 = vtanh.pop %v1101
  %v1109 = vmul.f32 %v1107, %v973
  %1111 = vrot.lane.b32.xlu0 %v1108, 32
  %v1112 = vpop.permute.xlu0 %1111
  %v1114 = vmul.f32 %v1107, %v1112
  %1116 = vrot.lane.b32.xlu0 %v1114, 32
  %v1117 = vpop.permute.xlu0 %1116
  %v1119 = vadd.f32 %v1109, %v1117
  %v1120 = vtanh.pop %v1119
  %1122 = vrot.lane.b32.xlu0 %v1120, 32
  %v1123 = vpop.permute.xlu0 %1122
  %v1125 = vmul.f32 %v1107, %v1123
  %v1126 = vpack.c.bf16 %v1125, %v1125
  %1128 = vrot.lane.b32.xlu0 %v1126, 64
  %v1129 = vpop.permute.xlu0 %1128
  %v1131 = vsel %vm673, %v1129, 0
  %1133 = vmatprep.subr.bf16.mxu0 %v666
  %1134 = vmatpush1.bf16.msra.mxu0 %v665
  %1135 = vmatprep.subr.bf16.mxu0 %v668
  %1136 = vmatpush1.bf16.msra.mxu0 %v667
  %1137 = vmatprep.subr.bf16.mxu0 0
  %1138 = vmatpush1.bf16.msra.mxu0 0
  %1139 = vmatprep.subr.bf16.mxu0 0
  %1140 = vmatpush1.bf16.msra.mxu0 0
  %1141 = vmatprep.subr.bf16.mxu0 0
  %1142 = vmatpush1.bf16.msra.mxu0 0
  %1143 = vmatprep.subr.bf16.mxu0 0
  %1144 = vmatpush1.bf16.msra.mxu0 0
  %1145 = vmatprep.subr.bf16.mxu0 0
  %1146 = vmatpush1.bf16.msra.mxu0 0
  %1147 = vmatprep.subr.bf16.mxu0 0
  %1148 = vmatpush1.bf16.msra.mxu0 0
  %1149 = vmatprep.subr.bf16.mxu0 0
  %1150 = vmatpush1.bf16.msra.mxu0 0
  %1151 = vmatprep.subr.bf16.mxu0 0
  %1152 = vmatpush1.bf16.msra.mxu0 0
  %1153 = vmatprep.subr.bf16.mxu0 0
  %1154 = vmatpush1.bf16.msra.mxu0 0
  %1155 = vmatprep.subr.bf16.mxu0 0
  %1156 = vmatpush1.bf16.msra.mxu0 0
  %1157 = vmatprep.subr.bf16.mxu0 0
  %1158 = vmatpush1.bf16.msra.mxu0 0
  %1159 = vmatprep.subr.bf16.mxu0 0
  %1160 = vmatpush1.bf16.msra.mxu0 0
  %1161 = vmatprep.subr.bf16.mxu0 0
  %1162 = vmatpush1.bf16.msra.mxu0 0
  %1163 = vmatprep.subr.bf16.mxu0 0
  %1164 = vmatpush1.bf16.msra.mxu0 0
  %1165 = vmatprep.mubr.bf16.mxu0 0
  %1166 = vmatmul.mubr.bf16.gmra.mrb[0].mxu0 %v1131
  %v1167 = vpop.f32.mrb[0].mxu0
  %v1168 = vadd.f32 0.0, %v1167
  %v1169 = vpop.f32.mrb[0].mxu0
  %v1170 = vadd.f32 0.0, %v1169
  %v1171 = vpop.f32.mrb[0].mxu0
  %v1172 = vpop.f32.mrb[0].mxu0
  %1173 = vdwg.mxu0
  %v1174 = vadd.f32 %v1170, %v722
  %v1175 = vpack.c.bf16 %v1100, %v1100
  %1177 = vrot.lane.b32.xlu0 %v1175, 64
  %v1178 = vpop.permute.xlu0 %1177
  %v1180 = vsel %vm673, %v1178, 0
  %1182 = vmatprep.subr.bf16.mxu0 0
  %1183 = vmatpush1.bf16.msra.mxu0 %v733
  %1184 = vmatprep.subr.bf16.mxu0 0
  %1185 = vmatpush1.bf16.msra.mxu0 %v734
  %1186 = vmatprep.subr.bf16.mxu0 0
  %1187 = vmatpush1.bf16.msra.mxu0 0
  %1188 = vmatprep.subr.bf16.mxu0 0
  %1189 = vmatpush1.bf16.msra.mxu0 0
  %1190 = vmatprep.subr.bf16.mxu0 0
  %1191 = vmatpush1.bf16.msra.mxu0 0
  %1192 = vmatprep.subr.bf16.mxu0 0
  %1193 = vmatpush1.bf16.msra.mxu0 0
  %1194 = vmatprep.subr.bf16.mxu0 0
  %1195 = vmatpush1.bf16.msra.mxu0 0
  %1196 = vmatprep.subr.bf16.mxu0 0
  %1197 = vmatpush1.bf16.msra.mxu0 0
  %1198 = vmatprep.subr.bf16.mxu0 0
  %1199 = vmatpush1.bf16.msra.mxu0 0
  %1200 = vmatprep.subr.bf16.mxu0 0
  %1201 = vmatpush1.bf16.msra.mxu0 0
  %1202 = vmatprep.subr.bf16.mxu0 0
  %1203 = vmatpush1.bf16.msra.mxu0 0
  %1204 = vmatprep.subr.bf16.mxu0 0
  %1205 = vmatpush1.bf16.msra.mxu0 0
  %1206 = vmatprep.subr.bf16.mxu0 0
  %1207 = vmatpush1.bf16.msra.mxu0 0
  %1208 = vmatprep.subr.bf16.mxu0 0
  %1209 = vmatpush1.bf16.msra.mxu0 0
  %1210 = vmatprep.subr.bf16.mxu0 0
  %1211 = vmatpush1.bf16.msra.mxu0 0
  %1212 = vmatprep.subr.bf16.mxu0 0
  %1213 = vmatpush1.bf16.msra.mxu0 0
  %1214 = vmatprep.mubr.bf16.mxu0 0
  %1215 = vmatmul.mubr.bf16.gmra.mrb[0].mxu0 %v1180
  %v1216 = vpop.f32.mrb[0].mxu0
  %v1217 = vadd.f32 0.0, %v1216
  %v1218 = vpop.f32.mrb[0].mxu0
  %v1219 = vpop.f32.mrb[0].mxu0
  %v1220 = vpop.f32.mrb[0].mxu0
  %1221 = vdwg.mxu0
  %v1222 = vadd.f32 %v1174, %v1217
  %v1223 = vxor.u32 %v1222, 2147483648
  %v1224 = vmul.f32 %v1223, 1.442695
  %v1225 = vpow.pop %v1224
  %v1226 = vadd.f32 %v1225, 1.0
  %v1227 = vrcp.pop %v1226
  %v1228 = vmul.f32 1.0, %v1227
  %v1229 = vtanh.pop %v1222
  %v1230 = vmul.f32 %v1228, %v1094
  %1232 = vrot.lane.b32.xlu0 %v1229, 32
  %v1233 = vpop.permute.xlu0 %1232
  %v1235 = vmul.f32 %v1228, %v1233
  %1237 = vrot.lane.b32.xlu0 %v1235, 32
  %v1238 = vpop.permute.xlu0 %1237
  %v1240 = vadd.f32 %v1230, %v1238
  %v1241 = vtanh.pop %v1240
  %1243 = vrot.lane.b32.xlu0 %v1241, 32
  %v1244 = vpop.permute.xlu0 %1243
  %v1246 = vmul.f32 %v1228, %v1244
  %v1247 = vadd.f32 %v584, %v1168
  %v1248 = vxor.u32 %v1247, 2147483648
  %v1249 = vmul.f32 %v1248, 1.442695
  %v1250 = vpow.pop %v1249
  %v1251 = vadd.f32 %v1250, 1.0
  %v1252 = vrcp.pop %v1251
  %v1253 = vmul.f32 1.0, %v1252
  %v1254 = vtanh.pop %v1247
  %v1255 = vmul.f32 %v1253, %v1119
  %1257 = vrot.lane.b32.xlu0 %v1254, 32
  %v1258 = vpop.permute.xlu0 %1257
  %v1260 = vmul.f32 %v1253, %v1258
  %1262 = vrot.lane.b32.xlu0 %v1260, 32
  %v1263 = vpop.permute.xlu0 %1262
  %v1265 = vadd.f32 %v1255, %v1263
  %v1266 = vtanh.pop %v1265
  %1268 = vrot.lane.b32.xlu0 %v1266, 32
  %v1269 = vpop.permute.xlu0 %1268
  %v1271 = vmul.f32 %v1253, %v1269
  %v1272 = vpack.c.bf16 %v1271, %v1271
  %1274 = vrot.lane.b32.xlu0 %v1272, 64
  %v1275 = vpop.permute.xlu0 %1274
  %v1277 = vsel %vm673, %v1275, 0
  %1279 = vmatprep.subr.bf16.mxu0 %v666
  %1280 = vmatpush1.bf16.msra.mxu0 %v665
  %1281 = vmatprep.subr.bf16.mxu0 %v668
  %1282 = vmatpush1.bf16.msra.mxu0 %v667
  %1283 = vmatprep.subr.bf16.mxu0 0
  %1284 = vmatpush1.bf16.msra.mxu0 0
  %1285 = vmatprep.subr.bf16.mxu0 0
  %1286 = vmatpush1.bf16.msra.mxu0 0
  %1287 = vmatprep.subr.bf16.mxu0 0
  %1288 = vmatpush1.bf16.msra.mxu0 0
  %1289 = vmatprep.subr.bf16.mxu0 0
  %1290 = vmatpush1.bf16.msra.mxu0 0
  %1291 = vmatprep.subr.bf16.mxu0 0
  %1292 = vmatpush1.bf16.msra.mxu0 0
  %1293 = vmatprep.subr.bf16.mxu0 0
  %1294 = vmatpush1.bf16.msra.mxu0 0
  %1295 = vmatprep.subr.bf16.mxu0 0
  %1296 = vmatpush1.bf16.msra.mxu0 0
  %1297 = vmatprep.subr.bf16.mxu0 0
  %1298 = vmatpush1.bf16.msra.mxu0 0
  %1299 = vmatprep.subr.bf16.mxu0 0
  %1300 = vmatpush1.bf16.msra.mxu0 0
  %1301 = vmatprep.subr.bf16.mxu0 0
  %1302 = vmatpush1.bf16.msra.mxu0 0
  %1303 = vmatprep.subr.bf16.mxu0 0
  %1304 = vmatpush1.bf16.msra.mxu0 0
  %1305 = vmatprep.subr.bf16.mxu0 0
  %1306 = vmatpush1.bf16.msra.mxu0 0
  %1307 = vmatprep.subr.bf16.mxu0 0
  %1308 = vmatpush1.bf16.msra.mxu0 0
  %1309 = vmatprep.subr.bf16.mxu0 0
  %1310 = vmatpush1.bf16.msra.mxu0 0
  %1311 = vmatprep.mubr.bf16.mxu0 0
  %1312 = vmatmul.mubr.bf16.gmra.mrb[0].mxu0 %v1277
  %v1313 = vpop.f32.mrb[0].mxu0
  %v1314 = vadd.f32 0.0, %v1313
  %v1315 = vpop.f32.mrb[0].mxu0
  %v1316 = vadd.f32 0.0, %v1315
  %v1317 = vpop.f32.mrb[0].mxu0
  %v1318 = vpop.f32.mrb[0].mxu0
  %1319 = vdwg.mxu0
  %v1320 = vadd.f32 %v1316, %v722
  %v1321 = vpack.c.bf16 %v1246, %v1246
  %1323 = vrot.lane.b32.xlu0 %v1321, 64
  %v1324 = vpop.permute.xlu0 %1323
  %v1326 = vsel %vm673, %v1324, 0
  %1328 = vmatprep.subr.bf16.mxu0 0
  %1329 = vmatpush1.bf16.msra.mxu0 %v733
  %1330 = vmatprep.subr.bf16.mxu0 0
  %1331 = vmatpush1.bf16.msra.mxu0 %v734
  %1332 = vmatprep.subr.bf16.mxu0 0
  %1333 = vmatpush1.bf16.msra.mxu0 0
  %1334 = vmatprep.subr.bf16.mxu0 0
  %1335 = vmatpush1.bf16.msra.mxu0 0
  %1336 = vmatprep.subr.bf16.mxu0 0
  %1337 = vmatpush1.bf16.msra.mxu0 0
  %1338 = vmatprep.subr.bf16.mxu0 0
  %1339 = vmatpush1.bf16.msra.mxu0 0
  %1340 = vmatprep.subr.bf16.mxu0 0
  %1341 = vmatpush1.bf16.msra.mxu0 0
  %1342 = vmatprep.subr.bf16.mxu0 0
  %1343 = vmatpush1.bf16.msra.mxu0 0
  %1344 = vmatprep.subr.bf16.mxu0 0
  %1345 = vmatpush1.bf16.msra.mxu0 0
  %1346 = vmatprep.subr.bf16.mxu0 0
  %1347 = vmatpush1.bf16.msra.mxu0 0
  %1348 = vmatprep.subr.bf16.mxu0 0
  %1349 = vmatpush1.bf16.msra.mxu0 0
  %1350 = vmatprep.subr.bf16.mxu0 0
  %1351 = vmatpush1.bf16.msra.mxu0 0
  %1352 = vmatprep.subr.bf16.mxu0 0
  %1353 = vmatpush1.bf16.msra.mxu0 0
  %1354 = vmatprep.subr.bf16.mxu0 0
  %1355 = vmatpush1.bf16.msra.mxu0 0
  %1356 = vmatprep.subr.bf16.mxu0 0
  %1357 = vmatpush1.bf16.msra.mxu0 0
  %1358 = vmatprep.subr.bf16.mxu0 0
  %1359 = vmatpush1.bf16.msra.mxu0 0
  %1360 = vmatprep.mubr.bf16.mxu0 0
  %1361 = vmatmul.mubr.bf16.gmra.mrb[0].mxu0 %v1326
  %v1362 = vpop.f32.mrb[0].mxu0
  %v1363 = vadd.f32 0.0, %v1362
  %v1364 = vpop.f32.mrb[0].mxu0
  %v1365 = vpop.f32.mrb[0].mxu0
  %v1366 = vpop.f32.mrb[0].mxu0
  %1367 = vdwg.mxu0
  %v1368 = vadd.f32 %v1320, %v1363
  %v1369 = vxor.u32 %v1368, 2147483648
  %v1370 = vmul.f32 %v1369, 1.442695
  %v1371 = vpow.pop %v1370
  %v1372 = vadd.f32 %v1371, 1.0
  %v1373 = vrcp.pop %v1372
  %v1374 = vmul.f32 1.0, %v1373
  %v1375 = vtanh.pop %v1368
  %v1376 = vmul.f32 %v1374, %v1240
  %1378 = vrot.lane.b32.xlu0 %v1375, 32
  %v1379 = vpop.permute.xlu0 %1378
  %v1381 = vmul.f32 %v1374, %v1379
  %1383 = vrot.lane.b32.xlu0 %v1381, 32
  %v1384 = vpop.permute.xlu0 %1383
  %v1386 = vadd.f32 %v1376, %v1384
  %v1387 = vtanh.pop %v1386
  %1389 = vrot.lane.b32.xlu0 %v1387, 32
  %v1390 = vpop.permute.xlu0 %1389
  %v1392 = vmul.f32 %v1374, %v1390
  %v1393 = vadd.f32 %v586, %v1314
  %v1394 = vxor.u32 %v1393, 2147483648
  %v1395 = vmul.f32 %v1394, 1.442695
  %v1396 = vpow.pop %v1395
  %v1397 = vadd.f32 %v1396, 1.0
  %v1398 = vrcp.pop %v1397
  %v1399 = vmul.f32 1.0, %v1398
  %v1400 = vtanh.pop %v1393
  %v1401 = vmul.f32 %v1399, %v1265
  %1403 = vrot.lane.b32.xlu0 %v1400, 32
  %v1404 = vpop.permute.xlu0 %1403
  %v1406 = vmul.f32 %v1399, %v1404
  %1408 = vrot.lane.b32.xlu0 %v1406, 32
  %v1409 = vpop.permute.xlu0 %1408
  %v1411 = vadd.f32 %v1401, %v1409
  %v1412 = vtanh.pop %v1411
  %1414 = vrot.lane.b32.xlu0 %v1412, 32
  %v1415 = vpop.permute.xlu0 %1414
  %v1417 = vmul.f32 %v1399, %v1415
  %v1418 = vpack.c.bf16 %v1417, %v1417
  %1420 = vrot.lane.b32.xlu0 %v1418, 64
  %v1421 = vpop.permute.xlu0 %1420
  %v1423 = vsel %vm673, %v1421, 0
  %1425 = vmatprep.subr.bf16.mxu0 %v666
  %1426 = vmatpush1.bf16.msra.mxu0 %v665
  %1427 = vmatprep.subr.bf16.mxu0 %v668
  %1428 = vmatpush1.bf16.msra.mxu0 %v667
  %1429 = vmatprep.subr.bf16.mxu0 0
  %1430 = vmatpush1.bf16.msra.mxu0 0
  %1431 = vmatprep.subr.bf16.mxu0 0
  %1432 = vmatpush1.bf16.msra.mxu0 0
  %1433 = vmatprep.subr.bf16.mxu0 0
  %1434 = vmatpush1.bf16.msra.mxu0 0
  %1435 = vmatprep.subr.bf16.mxu0 0
  %1436 = vmatpush1.bf16.msra.mxu0 0
  %1437 = vmatprep.subr.bf16.mxu0 0
  %1438 = vmatpush1.bf16.msra.mxu0 0
  %1439 = vmatprep.subr.bf16.mxu0 0
  %1440 = vmatpush1.bf16.msra.mxu0 0
  %1441 = vmatprep.subr.bf16.mxu0 0
  %1442 = vmatpush1.bf16.msra.mxu0 0
  %1443 = vmatprep.subr.bf16.mxu0 0
  %1444 = vmatpush1.bf16.msra.mxu0 0
  %1445 = vmatprep.subr.bf16.mxu0 0
  %1446 = vmatpush1.bf16.msra.mxu0 0
  %1447 = vmatprep.subr.bf16.mxu0 0
  %1448 = vmatpush1.bf16.msra.mxu0 0
  %1449 = vmatprep.subr.bf16.mxu0 0
  %1450 = vmatpush1.bf16.msra.mxu0 0
  %1451 = vmatprep.subr.bf16.mxu0 0
  %1452 = vmatpush1.bf16.msra.mxu0 0
  %1453 = vmatprep.subr.bf16.mxu0 0
  %1454 = vmatpush1.bf16.msra.mxu0 0
  %1455 = vmatprep.subr.bf16.mxu0 0
  %1456 = vmatpush1.bf16.msra.mxu0 0
  %1457 = vmatprep.mubr.bf16.mxu0 0
  %1458 = vmatmul.mubr.bf16.gmra.mrb[0].mxu0 %v1423
  %v1459 = vpop.f32.mrb[0].mxu0
  %v1460 = vadd.f32 0.0, %v1459
  %v1461 = vpop.f32.mrb[0].mxu0
  %v1462 = vadd.f32 0.0, %v1461
  %v1463 = vpop.f32.mrb[0].mxu0
  %v1464 = vpop.f32.mrb[0].mxu0
  %1465 = vdwg.mxu0
  %v1466 = vadd.f32 %v1462, %v722
  %v1467 = vpack.c.bf16 %v1392, %v1392
  %1469 = vrot.lane.b32.xlu0 %v1467, 64
  %v1470 = vpop.permute.xlu0 %1469
  %v1472 = vsel %vm673, %v1470, 0
  %1474 = vmatprep.subr.bf16.mxu0 0
  %1475 = vmatpush1.bf16.msra.mxu0 %v733
  %1476 = vmatprep.subr.bf16.mxu0 0
  %1477 = vmatpush1.bf16.msra.mxu0 %v734
  %1478 = vmatprep.subr.bf16.mxu0 0
  %1479 = vmatpush1.bf16.msra.mxu0 0
  %1480 = vmatprep.subr.bf16.mxu0 0
  %1481 = vmatpush1.bf16.msra.mxu0 0
  %1482 = vmatprep.subr.bf16.mxu0 0
  %1483 = vmatpush1.bf16.msra.mxu0 0
  %1484 = vmatprep.subr.bf16.mxu0 0
  %1485 = vmatpush1.bf16.msra.mxu0 0
  %1486 = vmatprep.subr.bf16.mxu0 0
  %1487 = vmatpush1.bf16.msra.mxu0 0
  %1488 = vmatprep.subr.bf16.mxu0 0
  %1489 = vmatpush1.bf16.msra.mxu0 0
  %1490 = vmatprep.subr.bf16.mxu0 0
  %1491 = vmatpush1.bf16.msra.mxu0 0
  %1492 = vmatprep.subr.bf16.mxu0 0
  %1493 = vmatpush1.bf16.msra.mxu0 0
  %1494 = vmatprep.subr.bf16.mxu0 0
  %1495 = vmatpush1.bf16.msra.mxu0 0
  %1496 = vmatprep.subr.bf16.mxu0 0
  %1497 = vmatpush1.bf16.msra.mxu0 0
  %1498 = vmatprep.subr.bf16.mxu0 0
  %1499 = vmatpush1.bf16.msra.mxu0 0
  %1500 = vmatprep.subr.bf16.mxu0 0
  %1501 = vmatpush1.bf16.msra.mxu0 0
  %1502 = vmatprep.subr.bf16.mxu0 0
  %1503 = vmatpush1.bf16.msra.mxu0 0
  %1504 = vmatprep.subr.bf16.mxu0 0
  %1505 = vmatpush1.bf16.msra.mxu0 0
  %1506 = vmatprep.mubr.bf16.mxu0 0
  %1507 = vmatmul.mubr.bf16.gmra.mrb[0].mxu0 %v1472
  %v1508 = vpop.f32.mrb[0].mxu0
  %v1509 = vadd.f32 0.0, %v1508
  %v1510 = vpop.f32.mrb[0].mxu0
  %v1511 = vpop.f32.mrb[0].mxu0
  %v1512 = vpop.f32.mrb[0].mxu0
  %1513 = vdwg.mxu0
  %v1514 = vadd.f32 %v1466, %v1509
  %v1515 = vxor.u32 %v1514, 2147483648
  %v1516 = vmul.f32 %v1515, 1.442695
  %v1517 = vpow.pop %v1516
  %v1518 = vadd.f32 %v1517, 1.0
  %v1519 = vrcp.pop %v1518
  %v1520 = vmul.f32 1.0, %v1519
  %v1521 = vtanh.pop %v1514
  %v1522 = vmul.f32 %v1520, %v1386
  %1524 = vrot.lane.b32.xlu0 %v1521, 32
  %v1525 = vpop.permute.xlu0 %1524
  %v1527 = vmul.f32 %v1520, %v1525
  %1529 = vrot.lane.b32.xlu0 %v1527, 32
  %v1530 = vpop.permute.xlu0 %1529
  %v1532 = vadd.f32 %v1522, %v1530
  %v1533 = vtanh.pop %v1532
  %1535 = vrot.lane.b32.xlu0 %v1533, 32
  %v1536 = vpop.permute.xlu0 %1535
  %v1538 = vmul.f32 %v1520, %v1536
  %v1539 = vadd.f32 %v625, %v1460
  %v1540 = vxor.u32 %v1539, 2147483648
  %v1541 = vmul.f32 %v1540, 1.442695
  %v1542 = vpow.pop %v1541
  %v1543 = vadd.f32 %v1542, 1.0
  %v1544 = vrcp.pop %v1543
  %v1545 = vmul.f32 1.0, %v1544
  %v1546 = vtanh.pop %v1539
  %v1547 = vmul.f32 %v1545, %v1411
  %1549 = vrot.lane.b32.xlu0 %v1546, 32
  %v1550 = vpop.permute.xlu0 %1549
  %v1552 = vmul.f32 %v1545, %v1550
  %1554 = vrot.lane.b32.xlu0 %v1552, 32
  %v1555 = vpop.permute.xlu0 %1554
  %v1557 = vadd.f32 %v1547, %v1555
  %v1558 = vtanh.pop %v1557
  %1560 = vrot.lane.b32.xlu0 %v1558, 32
  %v1561 = vpop.permute.xlu0 %1560
  %v1563 = vmul.f32 %v1545, %v1561
  %v1564 = vpack.c.bf16 %v1563, %v1563
  %1566 = vrot.lane.b32.xlu0 %v1564, 64
  %v1567 = vpop.permute.xlu0 %1566
  %v1569 = vsel %vm673, %v1567, 0
  %1571 = vmatprep.subr.bf16.mxu0 %v666
  %1572 = vmatpush1.bf16.msra.mxu0 %v665
  %1573 = vmatprep.subr.bf16.mxu0 %v668
  %1574 = vmatpush1.bf16.msra.mxu0 %v667
  %1575 = vmatprep.subr.bf16.mxu0 0
  %1576 = vmatpush1.bf16.msra.mxu0 0
  %1577 = vmatprep.subr.bf16.mxu0 0
  %1578 = vmatpush1.bf16.msra.mxu0 0
  %1579 = vmatprep.subr.bf16.mxu0 0
  %1580 = vmatpush1.bf16.msra.mxu0 0
  %1581 = vmatprep.subr.bf16.mxu0 0
  %1582 = vmatpush1.bf16.msra.mxu0 0
  %1583 = vmatprep.subr.bf16.mxu0 0
  %1584 = vmatpush1.bf16.msra.mxu0 0
  %1585 = vmatprep.subr.bf16.mxu0 0
  %1586 = vmatpush1.bf16.msra.mxu0 0
  %1587 = vmatprep.subr.bf16.mxu0 0
  %1588 = vmatpush1.bf16.msra.mxu0 0
  %1589 = vmatprep.subr.bf16.mxu0 0
  %1590 = vmatpush1.bf16.msra.mxu0 0
  %1591 = vmatprep.subr.bf16.mxu0 0
  %1592 = vmatpush1.bf16.msra.mxu0 0
  %1593 = vmatprep.subr.bf16.mxu0 0
  %1594 = vmatpush1.bf16.msra.mxu0 0
  %1595 = vmatprep.subr.bf16.mxu0 0
  %1596 = vmatpush1.bf16.msra.mxu0 0
  %1597 = vmatprep.subr.bf16.mxu0 0
  %1598 = vmatpush1.bf16.msra.mxu0 0
  %1599 = vmatprep.subr.bf16.mxu0 0
  %1600 = vmatpush1.bf16.msra.mxu0 0
  %1601 = vmatprep.subr.bf16.mxu0 0
  %1602 = vmatpush1.bf16.msra.mxu0 0
  %1603 = vmatprep.mubr.bf16.mxu0 0
  %1604 = vmatmul.mubr.bf16.gmra.mrb[0].mxu0 %v1569
  %v1605 = vpop.f32.mrb[0].mxu0
  %v1606 = vadd.f32 0.0, %v1605
  %v1607 = vpop.f32.mrb[0].mxu0
  %v1608 = vadd.f32 0.0, %v1607
  %v1609 = vpop.f32.mrb[0].mxu0
  %v1610 = vpop.f32.mrb[0].mxu0
  %1611 = vdwg.mxu0
  %v1612 = vadd.f32 %v1608, %v722
  %v1613 = vpack.c.bf16 %v1538, %v1538
  %1615 = vrot.lane.b32.xlu0 %v1613, 64
  %v1616 = vpop.permute.xlu0 %1615
  %v1618 = vsel %vm673, %v1616, 0
  %1620 = vmatprep.subr.bf16.mxu0 0
  %1621 = vmatpush1.bf16.msra.mxu0 %v733
  %1622 = vmatprep.subr.bf16.mxu0 0
  %1623 = vmatpush1.bf16.msra.mxu0 %v734
  %1624 = vmatprep.subr.bf16.mxu0 0
  %1625 = vmatpush1.bf16.msra.mxu0 0
  %1626 = vmatprep.subr.bf16.mxu0 0
  %1627 = vmatpush1.bf16.msra.mxu0 0
  %1628 = vmatprep.subr.bf16.mxu0 0
  %1629 = vmatpush1.bf16.msra.mxu0 0
  %1630 = vmatprep.subr.bf16.mxu0 0
  %1631 = vmatpush1.bf16.msra.mxu0 0
  %1632 = vmatprep.subr.bf16.mxu0 0
  %1633 = vmatpush1.bf16.msra.mxu0 0
  %1634 = vmatprep.subr.bf16.mxu0 0
  %1635 = vmatpush1.bf16.msra.mxu0 0
  %1636 = vmatprep.subr.bf16.mxu0 0
  %1637 = vmatpush1.bf16.msra.mxu0 0
  %1638 = vmatprep.subr.bf16.mxu0 0
  %1639 = vmatpush1.bf16.msra.mxu0 0
  %1640 = vmatprep.subr.bf16.mxu0 0
  %1641 = vmatpush1.bf16.msra.mxu0 0
  %1642 = vmatprep.subr.bf16.mxu0 0
  %1643 = vmatpush1.bf16.msra.mxu0 0
  %1644 = vmatprep.subr.bf16.mxu0 0
  %1645 = vmatpush1.bf16.msra.mxu0 0
  %1646 = vmatprep.subr.bf16.mxu0 0
  %1647 = vmatpush1.bf16.msra.mxu0 0
  %1648 = vmatprep.subr.bf16.mxu0 0
  %1649 = vmatpush1.bf16.msra.mxu0 0
  %1650 = vmatprep.subr.bf16.mxu0 0
  %1651 = vmatpush1.bf16.msra.mxu0 0
  %1652 = vmatprep.mubr.bf16.mxu0 0
  %1653 = vmatmul.mubr.bf16.gmra.mrb[0].mxu0 %v1618
  %v1654 = vpop.f32.mrb[0].mxu0
  %v1655 = vadd.f32 0.0, %v1654
  %v1656 = vpop.f32.mrb[0].mxu0
  %v1657 = vpop.f32.mrb[0].mxu0
  %v1658 = vpop.f32.mrb[0].mxu0
  %1659 = vdwg.mxu0
  %v1660 = vadd.f32 %v1612, %v1655
  %v1661 = vxor.u32 %v1660, 2147483648
  %v1662 = vmul.f32 %v1661, 1.442695
  %v1663 = vpow.pop %v1662
  %v1664 = vadd.f32 %v1663, 1.0
  %v1665 = vrcp.pop %v1664
  %v1666 = vmul.f32 1.0, %v1665
  %v1667 = vtanh.pop %v1660
  %v1668 = vmul.f32 %v1666, %v1532
  %1670 = vrot.lane.b32.xlu0 %v1667, 32
  %v1671 = vpop.permute.xlu0 %1670
  %v1673 = vmul.f32 %v1666, %v1671
  %1675 = vrot.lane.b32.xlu0 %v1673, 32
  %v1676 = vpop.permute.xlu0 %1675
  %v1678 = vadd.f32 %v1668, %v1676
  %v1679 = vtanh.pop %v1678
  %1681 = vrot.lane.b32.xlu0 %v1679, 32
  %v1682 = vpop.permute.xlu0 %1681
  %v1684 = vmul.f32 %v1666, %v1682
  %v1685 = vadd.f32 %v627, %v1606
  %v1686 = vxor.u32 %v1685, 2147483648
  %v1687 = vmul.f32 %v1686, 1.442695
  %v1688 = vpow.pop %v1687
  %v1689 = vadd.f32 %v1688, 1.0
  %v1690 = vrcp.pop %v1689
  %v1691 = vmul.f32 1.0, %v1690
  %v1692 = vtanh.pop %v1685
  %v1693 = vmul.f32 %v1691, %v1557
  %1695 = vrot.lane.b32.xlu0 %v1692, 32
  %v1696 = vpop.permute.xlu0 %1695
  %v1698 = vmul.f32 %v1691, %v1696
  %1700 = vrot.lane.b32.xlu0 %v1698, 32
  %v1701 = vpop.permute.xlu0 %1700
  %v1703 = vadd.f32 %v1693, %v1701
  %v1704 = vtanh.pop %v1703
  %1706 = vrot.lane.b32.xlu0 %v1704, 32
  %v1707 = vpop.permute.xlu0 %1706
  %v1709 = vmul.f32 %v1691, %v1707
  %v1710 = vpack.c.bf16 %v1709, %v1709
  %1712 = vrot.lane.b32.xlu0 %v1710, 64
  %v1713 = vpop.permute.xlu0 %1712
  %v1715 = vsel %vm673, %v1713, 0
  %1717 = vmatprep.subr.bf16.mxu0 %v666
  %1718 = vmatpush1.bf16.msra.mxu0 %v665
  %1719 = vmatprep.subr.bf16.mxu0 %v668
  %1720 = vmatpush1.bf16.msra.mxu0 %v667
  %1721 = vmatprep.subr.bf16.mxu0 0
  %1722 = vmatpush1.bf16.msra.mxu0 0
  %1723 = vmatprep.subr.bf16.mxu0 0
  %1724 = vmatpush1.bf16.msra.mxu0 0
  %1725 = vmatprep.subr.bf16.mxu0 0
  %1726 = vmatpush1.bf16.msra.mxu0 0
  %1727 = vmatprep.subr.bf16.mxu0 0
  %1728 = vmatpush1.bf16.msra.mxu0 0
  %1729 = vmatprep.subr.bf16.mxu0 0
  %1730 = vmatpush1.bf16.msra.mxu0 0
  %1731 = vmatprep.subr.bf16.mxu0 0
  %1732 = vmatpush1.bf16.msra.mxu0 0
  %1733 = vmatprep.subr.bf16.mxu0 0
  %1734 = vmatpush1.bf16.msra.mxu0 0
  %1735 = vmatprep.subr.bf16.mxu0 0
  %1736 = vmatpush1.bf16.msra.mxu0 0
  %1737 = vmatprep.subr.bf16.mxu0 0
  %1738 = vmatpush1.bf16.msra.mxu0 0
  %1739 = vmatprep.subr.bf16.mxu0 0
  %1740 = vmatpush1.bf16.msra.mxu0 0
  %1741 = vmatprep.subr.bf16.mxu0 0
  %1742 = vmatpush1.bf16.msra.mxu0 0
  %1743 = vmatprep.subr.bf16.mxu0 0
  %1744 = vmatpush1.bf16.msra.mxu0 0
  %1745 = vmatprep.subr.bf16.mxu0 0
  %1746 = vmatpush1.bf16.msra.mxu0 0
  %1747 = vmatprep.subr.bf16.mxu0 0
  %1748 = vmatpush1.bf16.msra.mxu0 0
  %1749 = vmatprep.mubr.bf16.mxu0 0
  %1750 = vmatmul.mubr.bf16.gmra.mrb[0].mxu0 %v1715
  %v1751 = vpop.f32.mrb[0].mxu0
  %v1752 = vpop.f32.mrb[0].mxu0
  %v1753 = vadd.f32 0.0, %v1752
  %v1754 = vpop.f32.mrb[0].mxu0
  %v1755 = vpop.f32.mrb[0].mxu0
  %1756 = vdwg.mxu0
  %v1757 = vadd.f32 %v1753, %v722
  %v1758 = vpack.c.bf16 %v1684, %v1684
  %1760 = vrot.lane.b32.xlu0 %v1758, 64
  %v1761 = vpop.permute.xlu0 %1760
  %v1763 = vsel %vm673, %v1761, 0
  %1765 = vmatprep.subr.bf16.mxu0 0
  %1766 = vmatpush1.bf16.msra.mxu0 %v733
  %1767 = vmatprep.subr.bf16.mxu0 0
  %1768 = vmatpush1.bf16.msra.mxu0 %v734
  %1769 = vmatprep.subr.bf16.mxu0 0
  %1770 = vmatpush1.bf16.msra.mxu0 0
  %1771 = vmatprep.subr.bf16.mxu0 0
  %1772 = vmatpush1.bf16.msra.mxu0 0
  %1773 = vmatprep.subr.bf16.mxu0 0
  %1774 = vmatpush1.bf16.msra.mxu0 0
  %1775 = vmatprep.subr.bf16.mxu0 0
  %1776 = vmatpush1.bf16.msra.mxu0 0
  %1777 = vmatprep.subr.bf16.mxu0 0
  %1778 = vmatpush1.bf16.msra.mxu0 0
  %1779 = vmatprep.subr.bf16.mxu0 0
  %1780 = vmatpush1.bf16.msra.mxu0 0
  %1781 = vmatprep.subr.bf16.mxu0 0
  %1782 = vmatpush1.bf16.msra.mxu0 0
  %1783 = vmatprep.subr.bf16.mxu0 0
  %1784 = vmatpush1.bf16.msra.mxu0 0
  %1785 = vmatprep.subr.bf16.mxu0 0
  %1786 = vmatpush1.bf16.msra.mxu0 0
  %1787 = vmatprep.subr.bf16.mxu0 0
  %1788 = vmatpush1.bf16.msra.mxu0 0
  %1789 = vmatprep.subr.bf16.mxu0 0
  %1790 = vmatpush1.bf16.msra.mxu0 0
  %1791 = vmatprep.subr.bf16.mxu0 0
  %1792 = vmatpush1.bf16.msra.mxu0 0
  %1793 = vmatprep.subr.bf16.mxu0 0
  %1794 = vmatpush1.bf16.msra.mxu0 0
  %1795 = vmatprep.subr.bf16.mxu0 0
  %1796 = vmatpush1.bf16.msra.mxu0 0
  %1797 = vmatprep.mubr.bf16.mxu0 0
  %1798 = vmatmul.mubr.bf16.gmra.mrb[0].mxu0 %v1763
  %v1799 = vpop.f32.mrb[0].mxu0
  %v1800 = vadd.f32 0.0, %v1799
  %v1801 = vpop.f32.mrb[0].mxu0
  %v1802 = vpop.f32.mrb[0].mxu0
  %v1803 = vpop.f32.mrb[0].mxu0
  %1804 = vdwg.mxu0
  %v1805 = vadd.f32 %v1757, %v1800
  %v1806 = vxor.u32 %v1805, 2147483648
  %v1807 = vmul.f32 %v1806, 1.442695
  %v1808 = vpow.pop %v1807
  %v1809 = vadd.f32 %v1808, 1.0
  %v1810 = vrcp.pop %v1809
  %v1811 = vmul.f32 1.0, %v1810
  %v1812 = vtanh.pop %v1805
  %v1813 = vmul.f32 %v1811, %v1678
  %1815 = vrot.lane.b32.xlu0 %v1812, 32
  %v1816 = vpop.permute.xlu0 %1815
  %v1818 = vmul.f32 %v1811, %v1816
  %1820 = vrot.lane.b32.xlu0 %v1818, 32
  %v1821 = vpop.permute.xlu0 %1820
  %v1823 = vadd.f32 %v1813, %v1821
  %v1824 = vtanh.pop %v1823
  %1826 = vrot.lane.b32.xlu0 %v1824, 32
  %v1827 = vpop.permute.xlu0 %1826
  %v1829 = vmul.f32 %v1811, %v1827
  %v1830 = vpack.c.bf16 %v1829, %v1829
  %v1831 = vld [vmem:[%s6] sm:$0xf]
  %v1832 = vld [vmem:[%s6 + $0x4] sm:$0xf]
  %v1833 = vld [vmem:[%s6 + $0x8] sm:$0xf]
  %v1834 = vld [vmem:[%s6 + $0xc] sm:$0xf]
  %v1835 = vld [vmem:[%s7] sm:$0x1]
  %v1837 = vlaneseq
  %v1838 = vshrl.u32 %v1837, 7
  %v1839 = vsub.s32 0, %v1838
  %v1840 = vrot.slane %v1835, %v1839
  %1843 = vrot.lane.b32.xlu0 %v1830, 64
  %v1844 = vpop.permute.xlu0 %1843
  %v1849 = vunpack.c.l.b16 %v1831
  %v1850 = vunpack.c.l.b16 %v1832
  %v1851 = vunpack.c.l.b16 %v1833
  %v1852 = vunpack.c.l.b16 %v1834
  %v1853 = vpack.c.b16 %v1850, %v1849
  %v1854 = vpack.c.b16 %v1852, %v1851
  %v1858 = vsel %vm673, %v1844, 0
  %1860 = vmatprep.subr.bf16.mxu0 0
  %1861 = vmatpush1.bf16.msra.mxu0 %v1853
  %1862 = vmatprep.subr.bf16.mxu0 0
  %1863 = vmatpush1.bf16.msra.mxu0 %v1854
  %1864 = vmatprep.subr.bf16.mxu0 0
  %1865 = vmatpush1.bf16.msra.mxu0 0
  %1866 = vmatprep.subr.bf16.mxu0 0
  %1867 = vmatpush1.bf16.msra.mxu0 0
  %1868 = vmatprep.subr.bf16.mxu0 0
  %1869 = vmatpush1.bf16.msra.mxu0 0
  %1870 = vmatprep.subr.bf16.mxu0 0
  %1871 = vmatpush1.bf16.msra.mxu0 0
  %1872 = vmatprep.subr.bf16.mxu0 0
  %1873 = vmatpush1.bf16.msra.mxu0 0
  %1874 = vmatprep.subr.bf16.mxu0 0
  %1875 = vmatpush1.bf16.msra.mxu0 0
  %1876 = vmatprep.subr.bf16.mxu0 0
  %1877 = vmatpush1.bf16.msra.mxu0 0
  %1878 = vmatprep.subr.bf16.mxu0 0
  %1879 = vmatpush1.bf16.msra.mxu0 0
  %1880 = vmatprep.subr.bf16.mxu0 0
  %1881 = vmatpush1.bf16.msra.mxu0 0
  %1882 = vmatprep.subr.bf16.mxu0 0
  %1883 = vmatpush1.bf16.msra.mxu0 0
  %1884 = vmatprep.subr.bf16.mxu0 0
  %1885 = vmatpush1.bf16.msra.mxu0 0
  %1886 = vmatprep.subr.bf16.mxu0 0
  %1887 = vmatpush1.bf16.msra.mxu0 0
  %1888 = vmatprep.subr.bf16.mxu0 0
  %1889 = vmatpush1.bf16.msra.mxu0 0
  %1890 = vmatprep.subr.bf16.mxu0 0
  %1891 = vmatpush1.bf16.msra.mxu0 0
  %1892 = vmatprep.mubr.bf16.mxu0 0
  %1893 = vmatmul.mubr.bf16.gmra.mrb[0].mxu0 %v1858
  %v1894 = vpop.f32.mrb[0].mxu0
  %v1895 = vadd.f32 %v1840, %v1894
  %v1896 = vpop.f32.mrb[0].mxu0
  %v1897 = vpop.f32.mrb[0].mxu0
  %v1898 = vpop.f32.mrb[0].mxu0
  %1899 = vdwg.mxu0
  %1900 = vst [vmem:[%s8] sm:$0xff] %v1895
  // Predicated region
  $region34: #{forward.1} parent=0 // pred_check
    _
  $region35: #{forward.1} parent=0 // pred_check_branch
    %1902 = sbr.rel (0) target = $region37
  $region36: #{forward.1} parent=0 // pred_region
    _
  $region37: #{forward.1} parent=0 // pred_fallthru
    _
  // Predicated region
  $region38: #{forward.1} parent=0 // pred_check
    _
  $region39: #{forward.1} parent=0 // pred_check_branch
    %1904 = sbr.rel (0) target = $region41
  $region40: #{forward.1} parent=0 // pred_region
    _
  $region41: #{forward.1} parent=0 // pred_fallthru
    _

</llo_original>
